<compile_context>
chip_gen: v7x
topology: tpu7x:2x2x1
jax: 0.10.0
libtpu: 0.0.40
codegen_flags: <defaults>
</compile_context>

<pallas_src>
import functools

import jax
import jax.numpy as jnp
from jax.experimental import pallas as pl
from jax.experimental.pallas import tpu as pltpu


def _round_up(x, m):
    return ((x + m - 1) // m) * m


# ----------------------------- Pallas kernel --------------------------------
def _pose2mesh_kernel(v_real,
                      x_ref, ljt_ref, ljt2_ref, ut_ref, lmt_ref, lmt2_ref,
                      w1_ref, b1_ref, w2_ref, b2_ref, w3_ref, b3_ref,
                      out_ref):
    """One batch element per grid step.  Activations are (features, nodes)."""
    f32 = jnp.float32
    bf16 = jnp.bfloat16

    def mm(a, b):
        # operands already in their final dtype; f32 accumulation on the MXU.
        return jnp.dot(a, b, preferred_element_type=f32)

    vp = lmt_ref.shape[-1]
    lane_valid = jax.lax.broadcasted_iota(jnp.int32, (1, vp), 1) < v_real

    # ---- joint-graph Chebyshev conv (kept fully f32: raw pixel / mm inputs) ----
    x0 = x_ref[0]                                     # (Cp, J)  f32
    x1 = mm(x0, ljt_ref[...])                         # X @ Aj
    x2 = mm(x0, ljt2_ref[...])                        # X @ Aj^2   (independent of x1)
    h = (mm(w1_ref[0], x0) + mm(w1_ref[1], x1) + mm(w1_ref[2], x2)
         + b1_ref[...])                               # (H, J)  f32
    h = jax.nn.relu(h).astype(bf16)                   # cast to bf16 exactly once

    # ---- lift joints -> mesh vertices (padded lanes of UT are zero) ----
    hm0 = mm(h, ut_ref[...]).astype(bf16)             # (H, Vp)

    lmt = lmt_ref[...]                                # (Vp, Vp) bf16, shared
    lmt2 = lmt2_ref[...]                              # (Vp, Vp) bf16, shared

    # ---- mesh-graph Chebyshev conv: H -> H, ReLU ----
    hm1 = mm(hm0, lmt).astype(bf16)
    hm2 = mm(hm0, lmt2).astype(bf16)
    g = (mm(w2_ref[0], hm0) + mm(w2_ref[1], hm1) + mm(w2_ref[2], hm2)
         + b2_ref[...])                               # (H, Vp) f32
    g = jnp.where(lane_valid, jax.nn.relu(g), 0.0).astype(bf16)

    # ---- mesh-graph Chebyshev conv: H -> 3 (padded to 8), linear ----
    g1 = mm(g, lmt).astype(bf16)
    g2 = mm(g, lmt2).astype(bf16)
    mesh = (mm(w3_ref[0], g) + mm(w3_ref[1], g1) + mm(w3_ref[2], g2)
            + b3_ref[...])                            # (Op, Vp) f32
    out_ref[0] = jnp.where(lane_valid, mesh, 0.0).astype(out_ref.dtype)


# -------------------------- parameter packing --------------------------------
def pack_params(params):
    """Build kernel-ready, padded constants (batch-independent, done once)."""
    Lj, Lm, U = params["L_joint"], params["L_mesh"], params["U"]
    w1, b1 = params["w1"], params["b1"]          # (K,5,H), (1,H)
    w2, b2 = params["w2"], params["b2"]          # (K,H,H), (1,H)
    w3, b3 = params["w3"], params["b3"]          # (K,H,3), (1,3)

    J = int(Lj.shape[0])
    V = int(Lm.shape[0])
    K, Cin, H = (int(s) for s in w1.shape)
    assert K == 3

    Cp = 8                                       # pad 5 input channels -> 8
    Op = 8                                       # pad 3 output channels -> 8
    Vp = _round_up(V, 128)                       # pad vertices -> lane multiple

    f32, bf16 = jnp.float32, jnp.bfloat16

    # Shared graph operators in right-multiplication form A = L^T, plus the
    # precomputed A^2 (removes the serial Chebyshev recurrence in the kernel).
    LjT = Lj.T.astype(f32)                                           # (J, J)
    LjT2 = (LjT @ LjT).astype(f32)
    Lm_p = jnp.zeros((Vp, Vp), f32).at[:V, :V].set(Lm)
    LmT = Lm_p.T                                                     # (Vp, Vp)
    LmT2 = LmT @ LmT
    U_p = jnp.zeros((Vp, J), f32).at[:V, :].set(U)
    UT = U_p.T                                                       # (J, Vp)

    # Fold the Chebyshev recurrence into the weights (exact algebra):
    #   Y = W0 T0 + W1 T1 + W2 (2 X A^2 - X) = (W0-W2) S0 + W1 S1 + (2 W2) S2
    def fold(w):                                   # (K, C, F) -> (3, F, C)
        stk = jnp.stack([w[0] - w[2], w[1], 2.0 * w[2]], axis=0)
        return jnp.transpose(stk, (0, 2, 1))

    # Layer 1: fold the /1000 of pose3d into the weights and pad 5 -> Cp (exact).
    scale = jnp.array([1.0, 1.0, 1e-3, 1e-3, 1e-3], f32)
    w1f = fold(w1 * scale[None, :, None])                            # (3, H, 5)
    w1f = jnp.zeros((3, H, Cp), f32).at[:, :, :Cin].set(w1f)

    w2f = fold(w2).astype(bf16)                                      # (3, H, H)

    w3f = fold(w3)                                                   # (3, 3, H)
    w3f = jnp.zeros((3, Op, H), f32).at[:, :3, :].set(w3f).astype(bf16)

    return dict(
        LjT=LjT, LjT2=LjT2,                        # f32: joint stage stays f32
        UT=UT.astype(bf16),
        LmT=LmT.astype(bf16), LmT2=LmT2.astype(bf16),
        W1=w1f, b1=b1.reshape(H, 1).astype(f32),
        W2=w2f, b2=b2.reshape(H, 1).astype(f32),
        W3=w3f, b3=jnp.zeros((Op, 1), f32).at[:3, :].set(b3.reshape(3, 1)),
        dims=dict(J=J, V=V, Vp=Vp, Cp=Cp, Op=Op, H=H),
    )


# ------------------------------ wrapper --------------------------------------
def flat_pose2mesh_forward(pose2d, pose3d, packed):
    """Returns (cam_mesh, pose3d) exactly like FlatPose2Mesh.forward."""
    d = packed["dims"]
    J, V, Vp, Cp, Op, H = d["J"], d["V"], d["Vp"], d["Cp"], d["Op"], d["H"]
    B = pose2d.shape[0]
    assert pose2d.shape[1] == J and pose3d.shape[1] == J

    # Layout glue (plain XLA): concat channels, zero-pad to Cp, transpose to
    # (B, Cp, J).  Kept f32 on purpose: pose2d/pose3d are raw-scale and the first
    # layer runs in f32 (the /1000 is already folded into W1).
    x = jnp.concatenate([pose2d, pose3d], axis=2).astype(jnp.float32)   # (B, J, 5)
    x = jnp.pad(x, ((0, 0), (0, 0), (0, Cp - x.shape[2])))              # (B, J, Cp)
    x_t = jnp.transpose(x, (0, 2, 1))                                   # (B, Cp, J)

    vmem = pltpu.MemorySpace.VMEM
    c2 = lambda *_: (0, 0)
    c3 = lambda *_: (0, 0, 0)
    in_specs = [
        pl.BlockSpec((1, Cp, J), lambda b: (b, 0, 0), memory_space=vmem),   # x
        pl.BlockSpec((J, J), c2, memory_space=vmem),                        # LjT
        pl.BlockSpec((J, J), c2, memory_space=vmem),                        # LjT2
        pl.BlockSpec((J, Vp), c2, memory_space=vmem),                       # UT
        pl.BlockSpec((Vp, Vp), c2, memory_space=vmem),                      # LmT
        pl.BlockSpec((Vp, Vp), c2, memory_space=vmem),                      # LmT2
        pl.BlockSpec((3, H, Cp), c3, memory_space=vmem),                    # W1
        pl.BlockSpec((H, 1), c2, memory_space=vmem),                        # b1
        pl.BlockSpec((3, H, H), c3, memory_space=vmem),                     # W2
        pl.BlockSpec((H, 1), c2, memory_space=vmem),                        # b2
        pl.BlockSpec((3, Op, H), c3, memory_space=vmem),                    # W3
        pl.BlockSpec((Op, 1), c2, memory_space=vmem),                       # b3
    ]
    out_specs = pl.BlockSpec((1, Op, Vp), lambda b: (b, 0, 0), memory_space=vmem)

    operands = (x_t, packed["LjT"], packed["LjT2"], packed["UT"], packed["LmT"],
                packed["LmT2"], packed["W1"], packed["b1"], packed["W2"],
                packed["b2"], packed["W3"], packed["b3"])

    flops_per_b = (
        2 * 2 * Cp * J * J            # joint Laplacian applications (A, A^2)
        + 3 * 2 * H * Cp * J          # joint weight matmuls
        + 2 * H * J * Vp              # joint -> vertex upsampling
        + 2 * 2 * 2 * H * Vp * Vp     # mesh Laplacian applications (2 layers x 2)
        + 3 * 2 * H * H * Vp          # mesh layer-2 weight matmuls
        + 3 * 2 * Op * H * Vp         # mesh layer-3 weight matmuls
    )
    bytes_accessed = int(sum(a.size * a.dtype.itemsize for a in operands)
                         + B * Op * Vp * 4)

    mesh_t = pl.pallas_call(
        functools.partial(_pose2mesh_kernel, V),
        grid=(B,),                                # batch axis -> v7x dual-TC parallel
        in_specs=in_specs,
        out_specs=out_specs,
        out_shape=jax.ShapeDtypeStruct((B, Op, Vp), jnp.float32),
        compiler_params=pltpu.CompilerParams(dimension_semantics=("parallel",)),
        cost_estimate=pl.CostEstimate(flops=B * flops_per_b, transcendentals=0,
                                      bytes_accessed=bytes_accessed),
    )(*operands)

    # lane-dense (B, Op, Vp) -> (B, V, 3)  (cheap XLA slice/transpose outside)
    cam_mesh = jnp.transpose(mesh_t[:, :3, :V], (0, 2, 1))
    return cam_mesh, pose3d


# ------------------------- deterministic parameters ---------------------------
def make_params(num_joint, num_verts, hidden, key):
    J, V, H, K = num_joint, num_verts, hidden, 3

    def chain_laplacian(n):
        # symmetric-normalized Laplacian of a chain graph, rescaled for Chebyshev
        a = jnp.zeros((n, n), jnp.float32)
        idx = jnp.arange(n - 1)
        a = a.at[idx, idx + 1].set(1.0).at[idx + 1, idx].set(1.0)
        d = jnp.sum(a, axis=1)
        dinv = 1.0 / jnp.sqrt(jnp.maximum(d, 1.0))
        lap = jnp.eye(n, dtype=jnp.float32) - dinv[:, None] * a * dinv[None, :]
        return lap - jnp.eye(n, dtype=jnp.float32)       # ~ 2L/lmax - I (lmax<=2)

    # fixed joint->vertex upsampling (nearest-joint assignment)
    v_idx = jnp.arange(V)
    j_of_v = (v_idx * J) // V
    up = jnp.zeros((V, J), jnp.float32).at[v_idx, j_of_v].set(1.0)

    ks = jax.random.split(key, 6)
    scale = lambda fan_in: 1.0 / jnp.sqrt(jnp.float32(fan_in))
    return {
        "L_joint": chain_laplacian(J),
        "L_mesh": chain_laplacian(V),
        "U": up,
        "w1": jax.random.normal(ks[0], (K, 5, H), jnp.float32) * scale(5 * K),
        "b1": jax.random.normal(ks[1], (1, H), jnp.float32) * 0.01,
        "w2": jax.random.normal(ks[2], (K, H, H), jnp.float32) * scale(H * K),
        "b2": jax.random.normal(ks[3], (1, H), jnp.float32) * 0.01,
        "w3": jax.random.normal(ks[4], (K, H, 3), jnp.float32) * scale(H * K),
        "b3": jax.random.normal(ks[5], (1, 3), jnp.float32) * 0.01,
    }


# ----------------------------------- main -------------------------------------
if __name__ == "__main__":
    B, J, V, H = 2, 8, 96, 32

    key = jax.random.PRNGKey(0)
    k_p2d, k_p3d, k_params = jax.random.split(key, 3)

    pose2d = jax.random.normal(k_p2d, (B, J, 2), jnp.float32) * 100.0   # pixels
    pose3d = jax.random.normal(k_p3d, (B, J, 3), jnp.float32) * 500.0   # millimeters

    params = make_params(J, V, H, k_params)
    packed = pack_params(params)            # one-time, batch-independent

    fwd = jax.jit(lambda a, b: flat_pose2mesh_forward(a, b, packed))
    cam_mesh, pose3d_out = fwd(pose2d, pose3d)
    jax.block_until_ready((cam_mesh, pose3d_out))

    assert cam_mesh.shape == (B, V, 3) and cam_mesh.dtype == jnp.float32
    assert pose3d_out.shape == (B, J, 3)
    assert bool(jnp.all(jnp.isfinite(cam_mesh)))
    assert bool(jnp.all(pose3d_out == pose3d))

    print("KERNEL_OK")
</pallas_src>

<mosaic_0001>
module attributes {stable_mosaic.version = 11 : i64} {
  func.func @_pose2mesh_kernel(%arg0: i32, %arg1: memref<1x8x8xf32, #tpu.memory_space<vmem>>, %arg2: memref<8x8xf32, #tpu.memory_space<vmem>>, %arg3: memref<8x8xf32, #tpu.memory_space<vmem>>, %arg4: memref<8x128xbf16, #tpu.memory_space<vmem>>, %arg5: memref<128x128xbf16, #tpu.memory_space<vmem>>, %arg6: memref<128x128xbf16, #tpu.memory_space<vmem>>, %arg7: memref<3x32x8xf32, #tpu.memory_space<vmem>>, %arg8: memref<32x1xf32, #tpu.memory_space<vmem>>, %arg9: memref<3x32x32xbf16, #tpu.memory_space<vmem>>, %arg10: memref<32x1xf32, #tpu.memory_space<vmem>>, %arg11: memref<3x8x32xbf16, #tpu.memory_space<vmem>>, %arg12: memref<8x1xf32, #tpu.memory_space<vmem>>, %arg13: memref<1x8x128xf32, #tpu.memory_space<vmem>>) attributes {dimension_semantics = [#tpu.dimension_semantics<parallel>], iteration_bounds = array<i64: 2>, scalar_prefetch = 0 : i64, scratch_operands = 0 : i64, tpu.core_type = #tpu.core_type<tc>, window_params = [{transform_indices = @transform_0, window_bounds = array<i64: 1, 8, 8>}, {pipeline_mode = #tpu.pipeline_mode<synchronous>, transform_indices = @transform_1, window_bounds = array<i64: 8, 8>}, {pipeline_mode = #tpu.pipeline_mode<synchronous>, transform_indices = @transform_2, window_bounds = array<i64: 8, 8>}, {pipeline_mode = #tpu.pipeline_mode<synchronous>, transform_indices = @transform_3, window_bounds = array<i64: 8, 128>}, {pipeline_mode = #tpu.pipeline_mode<synchronous>, transform_indices = @transform_4, window_bounds = array<i64: 128, 128>}, {pipeline_mode = #tpu.pipeline_mode<synchronous>, transform_indices = @transform_5, window_bounds = array<i64: 128, 128>}, {pipeline_mode = #tpu.pipeline_mode<synchronous>, transform_indices = @transform_6, window_bounds = array<i64: 3, 32, 8>}, {pipeline_mode = #tpu.pipeline_mode<synchronous>, transform_indices = @transform_7, window_bounds = array<i64: 32, 1>}, {pipeline_mode = #tpu.pipeline_mode<synchronous>, transform_indices = @transform_8, window_bounds = array<i64: 3, 32, 32>}, {pipeline_mode = #tpu.pipeline_mode<synchronous>, transform_indices = @transform_9, window_bounds = array<i64: 32, 1>}, {pipeline_mode = #tpu.pipeline_mode<synchronous>, transform_indices = @transform_10, window_bounds = array<i64: 3, 8, 32>}, {pipeline_mode = #tpu.pipeline_mode<synchronous>, transform_indices = @transform_11, window_bounds = array<i64: 8, 1>}, {transform_indices = @transform_12, window_bounds = array<i64: 1, 8, 128>}]} {
    %0 = tpu.iota {dimensions = array<i32: 1>} : vector<1x128xi32>
    %c96_i32 = arith.constant 96 : i32
    %1 = vector.broadcast %c96_i32 : i32 to vector<1x128xi32>
    %2 = arith.cmpi slt, %0, %1 : vector<1x128xi32>
    %c0 = arith.constant 0 : index
    %c0_0 = arith.constant 0 : index
    %c0_1 = arith.constant 0 : index
    %3 = vector.load %arg1[%c0, %c0_0, %c0_1] : memref<1x8x8xf32, #tpu.memory_space<vmem>>, vector<1x8x8xf32>
    %4 = vector.shape_cast %3 : vector<1x8x8xf32> to vector<8x8xf32>
    %c0_2 = arith.constant 0 : index
    %c0_3 = arith.constant 0 : index
    %5 = vector.load %arg2[%c0_2, %c0_3] : memref<8x8xf32, #tpu.memory_space<vmem>>, vector<8x8xf32>
    %cst = arith.constant dense<0.000000e+00> : vector<8x8xf32>
    %6 = tpu.matmul %4, %5, %cst {dimension_numbers = #tpu.dot_dimension_numbers<[1], [0], [0], [1], [0, 0, 1, 1], [], []>} : vector<8x8xf32>, vector<8x8xf32>, vector<8x8xf32> -> vector<8x8xf32>
    %c0_4 = arith.constant 0 : index
    %c0_5 = arith.constant 0 : index
    %7 = vector.load %arg3[%c0_4, %c0_5] : memref<8x8xf32, #tpu.memory_space<vmem>>, vector<8x8xf32>
    %cst_6 = arith.constant dense<0.000000e+00> : vector<8x8xf32>
    %8 = tpu.matmul %4, %7, %cst_6 {dimension_numbers = #tpu.dot_dimension_numbers<[1], [0], [0], [1], [0, 0, 1, 1], [], []>} : vector<8x8xf32>, vector<8x8xf32>, vector<8x8xf32> -> vector<8x8xf32>
    %c0_7 = arith.constant 0 : index
    %c0_8 = arith.constant 0 : index
    %c0_9 = arith.constant 0 : index
    %9 = vector.load %arg7[%c0_7, %c0_8, %c0_9] : memref<3x32x8xf32, #tpu.memory_space<vmem>>, vector<1x32x8xf32>
    %10 = vector.shape_cast %9 : vector<1x32x8xf32> to vector<32x8xf32>
    %cst_10 = arith.constant dense<0.000000e+00> : vector<32x8xf32>
    %11 = tpu.matmul %10, %4, %cst_10 {dimension_numbers = #tpu.dot_dimension_numbers<[1], [0], [0], [1], [0, 0, 1, 1], [], []>} : vector<32x8xf32>, vector<8x8xf32>, vector<32x8xf32> -> vector<32x8xf32>
    %c1 = arith.constant 1 : index
    %c0_11 = arith.constant 0 : index
    %c0_12 = arith.constant 0 : index
    %12 = vector.load %arg7[%c1, %c0_11, %c0_12] : memref<3x32x8xf32, #tpu.memory_space<vmem>>, vector<1x32x8xf32>
    %13 = vector.shape_cast %12 : vector<1x32x8xf32> to vector<32x8xf32>
    %cst_13 = arith.constant dense<0.000000e+00> : vector<32x8xf32>
    %14 = tpu.matmul %13, %6, %cst_13 {dimension_numbers = #tpu.dot_dimension_numbers<[1], [0], [0], [1], [0, 0, 1, 1], [], []>} : vector<32x8xf32>, vector<8x8xf32>, vector<32x8xf32> -> vector<32x8xf32>
    %15 = arith.addf %11, %14 : vector<32x8xf32>
    %c2 = arith.constant 2 : index
    %c0_14 = arith.constant 0 : index
    %c0_15 = arith.constant 0 : index
    %16 = vector.load %arg7[%c2, %c0_14, %c0_15] : memref<3x32x8xf32, #tpu.memory_space<vmem>>, vector<1x32x8xf32>
    %17 = vector.shape_cast %16 : vector<1x32x8xf32> to vector<32x8xf32>
    %cst_16 = arith.constant dense<0.000000e+00> : vector<32x8xf32>
    %18 = tpu.matmul %17, %8, %cst_16 {dimension_numbers = #tpu.dot_dimension_numbers<[1], [0], [0], [1], [0, 0, 1, 1], [], []>} : vector<32x8xf32>, vector<8x8xf32>, vector<32x8xf32> -> vector<32x8xf32>
    %19 = arith.addf %15, %18 : vector<32x8xf32>
    %c0_17 = arith.constant 0 : index
    %c0_18 = arith.constant 0 : index
    %20 = vector.load %arg8[%c0_17, %c0_18] : memref<32x1xf32, #tpu.memory_space<vmem>>, vector<32x1xf32>
    %21 = vector.broadcast %20 : vector<32x1xf32> to vector<32x8xf32>
    %22 = arith.addf %19, %21 : vector<32x8xf32>
    %cst_19 = arith.constant 0.000000e+00 : f32
    %23 = vector.broadcast %cst_19 : f32 to vector<32x8xf32>
    %24 = arith.maximumf %22, %23 : vector<32x8xf32>
    %25 = arith.truncf %24 : vector<32x8xf32> to vector<32x8xbf16>
    %c0_20 = arith.constant 0 : index
    %c0_21 = arith.constant 0 : index
    %26 = vector.load %arg4[%c0_20, %c0_21] : memref<8x128xbf16, #tpu.memory_space<vmem>>, vector<8x128xbf16>
    %cst_22 = arith.constant dense<0.000000e+00> : vector<32x128xf32>
    %27 = tpu.matmul %25, %26, %cst_22 {dimension_numbers = #tpu.dot_dimension_numbers<[1], [0], [0], [1], [0, 0, 1, 1], [], []>} : vector<32x8xbf16>, vector<8x128xbf16>, vector<32x128xf32> -> vector<32x128xf32>
    %28 = arith.truncf %27 : vector<32x128xf32> to vector<32x128xbf16>
    %c0_23 = arith.constant 0 : index
    %c0_24 = arith.constant 0 : index
    %29 = vector.load %arg5[%c0_23, %c0_24] : memref<128x128xbf16, #tpu.memory_space<vmem>>, vector<128x128xbf16>
    %c0_25 = arith.constant 0 : index
    %c0_26 = arith.constant 0 : index
    %30 = vector.load %arg6[%c0_25, %c0_26] : memref<128x128xbf16, #tpu.memory_space<vmem>>, vector<128x128xbf16>
    %cst_27 = arith.constant dense<0.000000e+00> : vector<32x128xf32>
    %31 = tpu.matmul %28, %29, %cst_27 {dimension_numbers = #tpu.dot_dimension_numbers<[1], [0], [0], [1], [0, 0, 1, 1], [], []>} : vector<32x128xbf16>, vector<128x128xbf16>, vector<32x128xf32> -> vector<32x128xf32>
    %32 = arith.truncf %31 : vector<32x128xf32> to vector<32x128xbf16>
    %cst_28 = arith.constant dense<0.000000e+00> : vector<32x128xf32>
    %33 = tpu.matmul %28, %30, %cst_28 {dimension_numbers = #tpu.dot_dimension_numbers<[1], [0], [0], [1], [0, 0, 1, 1], [], []>} : vector<32x128xbf16>, vector<128x128xbf16>, vector<32x128xf32> -> vector<32x128xf32>
    %34 = arith.truncf %33 : vector<32x128xf32> to vector<32x128xbf16>
    %c0_29 = arith.constant 0 : index
    %c0_30 = arith.constant 0 : index
    %c0_31 = arith.constant 0 : index
    %35 = vector.load %arg9[%c0_29, %c0_30, %c0_31] : memref<3x32x32xbf16, #tpu.memory_space<vmem>>, vector<1x32x32xbf16>
    %36 = vector.shape_cast %35 : vector<1x32x32xbf16> to vector<32x32xbf16>
    %cst_32 = arith.constant dense<0.000000e+00> : vector<32x128xf32>
    %37 = tpu.matmul %36, %28, %cst_32 {dimension_numbers = #tpu.dot_dimension_numbers<[1], [0], [0], [1], [0, 0, 1, 1], [], []>} : vector<32x32xbf16>, vector<32x128xbf16>, vector<32x128xf32> -> vector<32x128xf32>
    %c1_33 = arith.constant 1 : index
    %c0_34 = arith.constant 0 : index
    %c0_35 = arith.constant 0 : index
    %38 = vector.load %arg9[%c1_33, %c0_34, %c0_35] : memref<3x32x32xbf16, #tpu.memory_space<vmem>>, vector<1x32x32xbf16>
    %39 = vector.shape_cast %38 : vector<1x32x32xbf16> to vector<32x32xbf16>
    %cst_36 = arith.constant dense<0.000000e+00> : vector<32x128xf32>
    %40 = tpu.matmul %39, %32, %cst_36 {dimension_numbers = #tpu.dot_dimension_numbers<[1], [0], [0], [1], [0, 0, 1, 1], [], []>} : vector<32x32xbf16>, vector<32x128xbf16>, vector<32x128xf32> -> vector<32x128xf32>
    %41 = arith.addf %37, %40 : vector<32x128xf32>
    %c2_37 = arith.constant 2 : index
    %c0_38 = arith.constant 0 : index
    %c0_39 = arith.constant 0 : index
    %42 = vector.load %arg9[%c2_37, %c0_38, %c0_39] : memref<3x32x32xbf16, #tpu.memory_space<vmem>>, vector<1x32x32xbf16>
    %43 = vector.shape_cast %42 : vector<1x32x32xbf16> to vector<32x32xbf16>
    %cst_40 = arith.constant dense<0.000000e+00> : vector<32x128xf32>
    %44 = tpu.matmul %43, %34, %cst_40 {dimension_numbers = #tpu.dot_dimension_numbers<[1], [0], [0], [1], [0, 0, 1, 1], [], []>} : vector<32x32xbf16>, vector<32x128xbf16>, vector<32x128xf32> -> vector<32x128xf32>
    %45 = arith.addf %41, %44 : vector<32x128xf32>
    %c0_41 = arith.constant 0 : index
    %c0_42 = arith.constant 0 : index
    %46 = vector.load %arg10[%c0_41, %c0_42] : memref<32x1xf32, #tpu.memory_space<vmem>>, vector<32x1xf32>
    %47 = vector.broadcast %46 : vector<32x1xf32> to vector<32x128xf32>
    %48 = arith.addf %45, %47 : vector<32x128xf32>
    %cst_43 = arith.constant 0.000000e+00 : f32
    %49 = vector.broadcast %cst_43 : f32 to vector<32x128xf32>
    %50 = arith.maximumf %48, %49 : vector<32x128xf32>
    %cst_44 = arith.constant 0.000000e+00 : f32
    %51 = vector.shape_cast %2 : vector<1x128xi1> to vector<1x128xi1>
    %52 = vector.broadcast %51 : vector<1x128xi1> to vector<32x128xi1>
    %53 = vector.broadcast %cst_44 : f32 to vector<32x128xf32>
    %54 = arith.select %52, %50, %53 : vector<32x128xi1>, vector<32x128xf32>
    %55 = arith.truncf %54 : vector<32x128xf32> to vector<32x128xbf16>
    %cst_45 = arith.constant dense<0.000000e+00> : vector<32x128xf32>
    %56 = tpu.matmul %55, %29, %cst_45 {dimension_numbers = #tpu.dot_dimension_numbers<[1], [0], [0], [1], [0, 0, 1, 1], [], []>} : vector<32x128xbf16>, vector<128x128xbf16>, vector<32x128xf32> -> vector<32x128xf32>
    %57 = arith.truncf %56 : vector<32x128xf32> to vector<32x128xbf16>
    %cst_46 = arith.constant dense<0.000000e+00> : vector<32x128xf32>
    %58 = tpu.matmul %55, %30, %cst_46 {dimension_numbers = #tpu.dot_dimension_numbers<[1], [0], [0], [1], [0, 0, 1, 1], [], []>} : vector<32x128xbf16>, vector<128x128xbf16>, vector<32x128xf32> -> vector<32x128xf32>
    %59 = arith.truncf %58 : vector<32x128xf32> to vector<32x128xbf16>
    %c0_47 = arith.constant 0 : index
    %c0_48 = arith.constant 0 : index
    %c0_49 = arith.constant 0 : index
    %60 = vector.load %arg11[%c0_47, %c0_48, %c0_49] : memref<3x8x32xbf16, #tpu.memory_space<vmem>>, vector<1x8x32xbf16>
    %61 = vector.shape_cast %60 : vector<1x8x32xbf16> to vector<8x32xbf16>
    %cst_50 = arith.constant dense<0.000000e+00> : vector<8x128xf32>
    %62 = tpu.matmul %61, %55, %cst_50 {dimension_numbers = #tpu.dot_dimension_numbers<[1], [0], [0], [1], [0, 0, 1, 1], [], []>} : vector<8x32xbf16>, vector<32x128xbf16>, vector<8x128xf32> -> vector<8x128xf32>
    %c1_51 = arith.constant 1 : index
    %c0_52 = arith.constant 0 : index
    %c0_53 = arith.constant 0 : index
    %63 = vector.load %arg11[%c1_51, %c0_52, %c0_53] : memref<3x8x32xbf16, #tpu.memory_space<vmem>>, vector<1x8x32xbf16>
    %64 = vector.shape_cast %63 : vector<1x8x32xbf16> to vector<8x32xbf16>
    %cst_54 = arith.constant dense<0.000000e+00> : vector<8x128xf32>
    %65 = tpu.matmul %64, %57, %cst_54 {dimension_numbers = #tpu.dot_dimension_numbers<[1], [0], [0], [1], [0, 0, 1, 1], [], []>} : vector<8x32xbf16>, vector<32x128xbf16>, vector<8x128xf32> -> vector<8x128xf32>
    %66 = arith.addf %62, %65 : vector<8x128xf32>
    %c2_55 = arith.constant 2 : index
    %c0_56 = arith.constant 0 : index
    %c0_57 = arith.constant 0 : index
    %67 = vector.load %arg11[%c2_55, %c0_56, %c0_57] : memref<3x8x32xbf16, #tpu.memory_space<vmem>>, vector<1x8x32xbf16>
    %68 = vector.shape_cast %67 : vector<1x8x32xbf16> to vector<8x32xbf16>
    %cst_58 = arith.constant dense<0.000000e+00> : vector<8x128xf32>
    %69 = tpu.matmul %68, %59, %cst_58 {dimension_numbers = #tpu.dot_dimension_numbers<[1], [0], [0], [1], [0, 0, 1, 1], [], []>} : vector<8x32xbf16>, vector<32x128xbf16>, vector<8x128xf32> -> vector<8x128xf32>
    %70 = arith.addf %66, %69 : vector<8x128xf32>
    %c0_59 = arith.constant 0 : index
    %c0_60 = arith.constant 0 : index
    %71 = vector.load %arg12[%c0_59, %c0_60] : memref<8x1xf32, #tpu.memory_space<vmem>>, vector<8x1xf32>
    %72 = vector.broadcast %71 : vector<8x1xf32> to vector<8x128xf32>
    %73 = arith.addf %70, %72 : vector<8x128xf32>
    %cst_61 = arith.constant 0.000000e+00 : f32
    %74 = vector.shape_cast %2 : vector<1x128xi1> to vector<1x128xi1>
    %75 = vector.broadcast %74 : vector<1x128xi1> to vector<8x128xi1>
    %76 = vector.broadcast %cst_61 : f32 to vector<8x128xf32>
    %77 = arith.select %75, %73, %76 : vector<8x128xi1>, vector<8x128xf32>
    %c0_62 = arith.constant 0 : index
    %c0_63 = arith.constant 0 : index
    %c0_64 = arith.constant 0 : index
    %78 = vector.load %arg13[%c0_62, %c0_63, %c0_64] : memref<1x8x128xf32, #tpu.memory_space<vmem>>, vector<1x8x128xf32>
    %79 = vector.shape_cast %78 : vector<1x8x128xf32> to vector<8x128xf32>
    %80 = vector.shape_cast %77 : vector<8x128xf32> to vector<1x8x128xf32>
    tpu.vector_store %arg13[%c0_62, %c0_63, %c0_64], %80 {strides = array<i32>} : memref<1x8x128xf32, #tpu.memory_space<vmem>>, vector<1x8x128xf32>,
    return
  }
  func.func @transform_0(%arg0: i32) -> (i32, i32, i32) {
    %c0_i32 = arith.constant 0 : i32
    %c0_i32_0 = arith.constant 0 : i32
    %c0_i32_1 = arith.constant 0 : i32
    return %arg0, %c0_i32, %c0_i32_0 : i32, i32, i32
  }
  func.func @transform_1(%arg0: i32) -> (i32, i32) {
    %c0_i32 = arith.constant 0 : i32
    %c0_i32_0 = arith.constant 0 : i32
    %c0_i32_1 = arith.constant 0 : i32
    return %c0_i32, %c0_i32_0 : i32, i32
  }
  func.func @transform_2(%arg0: i32) -> (i32, i32) {
    %c0_i32 = arith.constant 0 : i32
    %c0_i32_0 = arith.constant 0 : i32
    %c0_i32_1 = arith.constant 0 : i32
    return %c0_i32, %c0_i32_0 : i32, i32
  }
  func.func @transform_3(%arg0: i32) -> (i32, i32) {
    %c0_i32 = arith.constant 0 : i32
    %c0_i32_0 = arith.constant 0 : i32
    %c0_i32_1 = arith.constant 0 : i32
    return %c0_i32, %c0_i32_0 : i32, i32
  }
  func.func @transform_4(%arg0: i32) -> (i32, i32) {
    %c0_i32 = arith.constant 0 : i32
    %c0_i32_0 = arith.constant 0 : i32
    %c0_i32_1 = arith.constant 0 : i32
    return %c0_i32, %c0_i32_0 : i32, i32
  }
  func.func @transform_5(%arg0: i32) -> (i32, i32) {
    %c0_i32 = arith.constant 0 : i32
    %c0_i32_0 = arith.constant 0 : i32
    %c0_i32_1 = arith.constant 0 : i32
    return %c0_i32, %c0_i32_0 : i32, i32
  }
  func.func @transform_6(%arg0: i32) -> (i32, i32, i32) {
    %c0_i32 = arith.constant 0 : i32
    %c0_i32_0 = arith.constant 0 : i32
    %c0_i32_1 = arith.constant 0 : i32
    %c0_i32_2 = arith.constant 0 : i32
    return %c0_i32, %c0_i32_0, %c0_i32_1 : i32, i32, i32
  }
  func.func @transform_7(%arg0: i32) -> (i32, i32) {
    %c0_i32 = arith.constant 0 : i32
    %c0_i32_0 = arith.constant 0 : i32
    %c0_i32_1 = arith.constant 0 : i32
    return %c0_i32, %c0_i32_0 : i32, i32
  }
  func.func @transform_8(%arg0: i32) -> (i32, i32, i32) {
    %c0_i32 = arith.constant 0 : i32
    %c0_i32_0 = arith.constant 0 : i32
    %c0_i32_1 = arith.constant 0 : i32
    %c0_i32_2 = arith.constant 0 : i32
    return %c0_i32, %c0_i32_0, %c0_i32_1 : i32, i32, i32
  }
  func.func @transform_9(%arg0: i32) -> (i32, i32) {
    %c0_i32 = arith.constant 0 : i32
    %c0_i32_0 = arith.constant 0 : i32
    %c0_i32_1 = arith.constant 0 : i32
    return %c0_i32, %c0_i32_0 : i32, i32
  }
  func.func @transform_10(%arg0: i32) -> (i32, i32, i32) {
    %c0_i32 = arith.constant 0 : i32
    %c0_i32_0 = arith.constant 0 : i32
    %c0_i32_1 = arith.constant 0 : i32
    %c0_i32_2 = arith.constant 0 : i32
    return %c0_i32, %c0_i32_0, %c0_i32_1 : i32, i32, i32
  }
  func.func @transform_11(%arg0: i32) -> (i32, i32) {
    %c0_i32 = arith.constant 0 : i32
    %c0_i32_0 = arith.constant 0 : i32
    %c0_i32_1 = arith.constant 0 : i32
    return %c0_i32, %c0_i32_0 : i32, i32
  }
  func.func @transform_12(%arg0: i32) -> (i32, i32, i32) {
    %c0_i32 = arith.constant 0 : i32
    %c0_i32_0 = arith.constant 0 : i32
    %c0_i32_1 = arith.constant 0 : i32
    return %arg0, %c0_i32, %c0_i32_0 : i32, i32, i32
  }
}

</mosaic_0001>

<llo_original>
// kernel: _lambda_.1
$region0: #{_lambda_.1}
  #allocation0 [shape = 'u32[]', space=smem, size = 0x4, offset = 0x4, fixed_abs, tag = 'smem constant byte address 0x4 - core index']
  #allocation1 [shape = 'u32[144,128]{1,0:T(1,128)}', space=vmem, size = 0x12000, scoped, tag = 'internal scratch']
  %s0 = inlined_call_operand.vmem [shape: f32[2,8,8], index: 0, kind: input, shape index: {}]
  %s1 = inlined_call_operand.hbm [shape: f32[8,8], index: 1, kind: input, shape index: {}]
  %s2 = inlined_call_operand.hbm [shape: f32[8,8], index: 2, kind: input, shape index: {}]
  %s3 = inlined_call_operand.hbm [shape: bf16[8,128], index: 3, kind: input, shape index: {}]
  %s4 = inlined_call_operand.vmem [shape: bf16[128,128], index: 4, kind: input, shape index: {}]
  %s5 = inlined_call_operand.hbm [shape: bf16[128,128], index: 5, kind: input, shape index: {}]
  %s6 = inlined_call_operand.hbm [shape: f32[3,32,8], index: 6, kind: input, shape index: {}]
  %s7 = inlined_call_operand.vmem [shape: f32[32,1], index: 7, kind: input, shape index: {}]
  %s8 = inlined_call_operand.hbm [shape: bf16[3,32,32], index: 8, kind: input, shape index: {}]
  %s9 = inlined_call_operand.hbm [shape: f32[32,1], index: 9, kind: input, shape index: {}]
  %s10 = inlined_call_operand.hbm [shape: bf16[3,8,32], index: 10, kind: input, shape index: {}]
  %s11 = inlined_call_operand.hbm [shape: f32[8,1], index: 11, kind: input, shape index: {}]
  %s12 = inlined_call_operand.vmem [shape: f32[2,8,128], index: 12, kind: output, shape index: {}]
  %s13 = sld [smem:[#allocation0]]
  $region117: #{_lambda_.1} parent=0
    _
  %s15 = ssub.s32 1, %s13
  %s16 = scalar_select 0, %s15, %s13
  $region1: #{_lambda_.1} parent=0
    #allocation2 [shape = 'u8[4096]{0}', space=vmem, size = 0x1000, scoped, tag = 'input window, operand 1, single buffered']
    #allocation3 [shape = 's32[2]{0}', space=sflag, size = 0x8, scoped, tag = 'scoped memory for _lambda_.1']
    #allocation4 [shape = 'u8[4096]{0}', space=vmem, size = 0x1000, scoped, tag = 'input window, operand 2, single buffered']
    #allocation5 [shape = 's32[1]{0}', space=sflag, size = 0x4, scoped, tag = 'scoped memory for _lambda_.1']
    #allocation6 [shape = 'u8[2048]{0}', space=vmem, size = 0x800, scoped, tag = 'input window, operand 3, single buffered']
    #allocation7 [shape = 'u8[32768]{0}', space=vmem, size = 0x8000, scoped, tag = 'input window, operand 5, single buffered']
    #allocation8 [shape = 's32[1]{0}', space=sflag, size = 0x4, scoped, tag = 'scoped memory for _lambda_.1']
    #allocation9 [shape = 'u8[49152]{0}', space=vmem, size = 0xc000, scoped, tag = 'input window, operand 6, single buffered']
    #allocation10 [shape = 'u8[24576]{0}', space=vmem, size = 0x6000, scoped, tag = 'input window, operand 8, single buffered']
    #allocation11 [shape = 's32[1]{0}', space=sflag, size = 0x4, scoped, tag = 'scoped memory for _lambda_.1']
    #allocation12 [shape = 'u8[16384]{0}', space=vmem, size = 0x4000, scoped, tag = 'input window, operand 9, single buffered']
    #allocation13 [shape = 'u8[6144]{0}', space=vmem, size = 0x1800, scoped, tag = 'input window, operand 10, single buffered']
    #allocation14 [shape = 's32[1]{0}', space=sflag, size = 0x4, scoped, tag = 'scoped memory for _lambda_.1']
    #allocation15 [shape = 'u8[4096]{0}', space=vmem, size = 0x1000, scoped, tag = 'input window, operand 11, single buffered']
    %17 = vsyncpa [#allocation3], 0
    %18 = vsyncpa [#allocation5], 0
    %19 = vsyncpa [#allocation8], 0
    %20 = vsyncpa [#allocation11], 0
    %21 = vsyncpa [#allocation14], 0
    loop: start=0, step=1, limit=4
    $region2: #{_lambda_.1} parent=1 // loop_pre_header
      _
    $region3: #{_lambda_.1} parent=1 // loop_header
      %s23 = sphi 0, %s27
      %p24 = scmp.ge.s32.totalorder %s23, 4
      %s33 = sphi 0, %s35
      %s36 = sphi 0, %s33
      %s37 = sphi 0, %s36
      %s53 = sphi 0, %s37
      %s57 = sphi 0, %s57
      %s59 = sphi 0, %s57
      %s60 = sphi 0, %s59
      %s74 = sphi 0, %s60
      %s78 = sphi 0, %s78
      %s80 = sphi 0, %s78
      %s81 = sphi 0, %s80
      %s95 = sphi 0, %s81
      %s99 = sphi 0, %s99
      %s101 = sphi 0, %s99
      %s102 = sphi 0, %s101
      %s116 = sphi 0, %s102
      %s120 = sphi 0, %s120
      %s122 = sphi 0, %s120
      %s123 = sphi 0, %s122
      %s137 = sphi 0, %s123
      %s141 = sphi 0, %s141
      %s143 = sphi 0, %s141
      %s144 = sphi 0, %s143
      %s158 = sphi 0, %s144
      %s162 = sphi 0, %s162
      %s164 = sphi 0, %s162
      %s165 = sphi 0, %s164
      %s179 = sphi 0, %s165
      %s183 = sphi 0, %s183
      %s185 = sphi 0, %s183
      %s186 = sphi 0, %s185
      %s200 = sphi 0, %s186
      %s204 = sphi 0, %s204
      %s206 = sphi 0, %s204
      %s207 = sphi 0, %s206
      %s221 = sphi 0, %s207
      %s225 = sphi 0, %s225
      %s227 = sphi 0, %s225
      %s228 = sphi 0, %s227
      %s242 = sphi 0, %s228
      %s246 = sphi 0, %s246
      %s248 = sphi 0, %s246
      %s249 = sphi 0, %s248
      %s263 = sphi 0, %s249
      %s267 = sphi 0, %s267
      %s269 = sphi 0, %s267
      %s270 = sphi 0, %s269
      %s284 = sphi 0, %s270
      %s290 = sphi 0, %s292
      %s293 = sphi 0, %s290
      %s294 = sphi 0, %s293
      %s310 = sphi 0, %s294
    $region4: #{_lambda_.1} parent=1 // loop_header_branch
      %26 = sbr.rel (%p24) target = $region8
    $region5: #{_lambda_.1} parent=1 // loop_body
      %s28 = ssub.s32 %s23, 1
      %s29 = ssub.s32 %s23, 2
      %s30 = sadd.s32 %s23, 1
      %s31 = ssub.s32 %s23, %s30
      %p32 = scmp.eq.s32.totalorder %s31, 0
      %s34 = sadd.s32 %s33, 1
      %s35 = scalar_select %p32, %s33, %s34
      %p38 = pneg %p32
      %p39 = scmp.eq.s32.totalorder %s23, 1
      %p40 = por %p38, %p39
      %p41 = scmp.ne.s32.totalorder %s33, %s36
      %p42 = scmp.eq.s32.totalorder %s23, 0
      %p43 = por %p41, %p42
      %p44 = scmp.ne.s32.totalorder %s33, %s36
      %p45 = scmp.eq.s32.totalorder %s28, 1
      %p46 = por %p44, %p45
      %p47 = scmp.ne.s32.totalorder %s36, %s37
      %p48 = scmp.eq.s32.totalorder %s28, 0
      %p49 = por %p47, %p48
      %p50 = scmp.ne.s32.totalorder %s36, %s37
      %p51 = scmp.eq.s32.totalorder %s29, 1
      %p52 = por %p50, %p51
      %p54 = scmp.ne.s32.totalorder %s37, %s53
      %p55 = scmp.eq.s32.totalorder %s29, 0
      %p56 = por %p54, %p55
      %s58 = sadd.s32 %s57, 1
      %p61 = scmp.eq.s32.totalorder %s23, 1
      %p62 = scmp.ne.s32.totalorder %s57, %s59
      %p63 = scmp.eq.s32.totalorder %s23, 0
      %p64 = por %p62, %p63
      %p65 = scmp.ne.s32.totalorder %s57, %s59
      %p66 = scmp.eq.s32.totalorder %s28, 1
      %p67 = por %p65, %p66
      %p68 = scmp.ne.s32.totalorder %s59, %s60
      %p69 = scmp.eq.s32.totalorder %s28, 0
      %p70 = por %p68, %p69
      %p71 = scmp.ne.s32.totalorder %s59, %s60
      %p72 = scmp.eq.s32.totalorder %s29, 1
      %p73 = por %p71, %p72
      %p75 = scmp.ne.s32.totalorder %s60, %s74
      %p76 = scmp.eq.s32.totalorder %s29, 0
      %p77 = por %p75, %p76
      %s79 = sadd.s32 %s78, 1
      %p82 = scmp.eq.s32.totalorder %s23, 1
      %p83 = scmp.ne.s32.totalorder %s78, %s80
      %p84 = scmp.eq.s32.totalorder %s23, 0
      %p85 = por %p83, %p84
      %p86 = scmp.ne.s32.totalorder %s78, %s80
      %p87 = scmp.eq.s32.totalorder %s28, 1
      %p88 = por %p86, %p87
      %p89 = scmp.ne.s32.totalorder %s80, %s81
      %p90 = scmp.eq.s32.totalorder %s28, 0
      %p91 = por %p89, %p90
      %p92 = scmp.ne.s32.totalorder %s80, %s81
      %p93 = scmp.eq.s32.totalorder %s29, 1
      %p94 = por %p92, %p93
      %p96 = scmp.ne.s32.totalorder %s81, %s95
      %p97 = scmp.eq.s32.totalorder %s29, 0
      %p98 = por %p96, %p97
      %s100 = sadd.s32 %s99, 1
      %p103 = scmp.eq.s32.totalorder %s23, 1
      %p104 = scmp.ne.s32.totalorder %s99, %s101
      %p105 = scmp.eq.s32.totalorder %s23, 0
      %p106 = por %p104, %p105
      %p107 = scmp.ne.s32.totalorder %s99, %s101
      %p108 = scmp.eq.s32.totalorder %s28, 1
      %p109 = por %p107, %p108
      %p110 = scmp.ne.s32.totalorder %s101, %s102
      %p111 = scmp.eq.s32.totalorder %s28, 0
      %p112 = por %p110, %p111
      %p113 = scmp.ne.s32.totalorder %s101, %s102
      %p114 = scmp.eq.s32.totalorder %s29, 1
      %p115 = por %p113, %p114
      %p117 = scmp.ne.s32.totalorder %s102, %s116
      %p118 = scmp.eq.s32.totalorder %s29, 0
      %p119 = por %p117, %p118
      %s121 = sadd.s32 %s120, 1
      %p124 = scmp.eq.s32.totalorder %s23, 1
      %p125 = scmp.ne.s32.totalorder %s120, %s122
      %p126 = scmp.eq.s32.totalorder %s23, 0
      %p127 = por %p125, %p126
      %p128 = scmp.ne.s32.totalorder %s120, %s122
      %p129 = scmp.eq.s32.totalorder %s28, 1
      %p130 = por %p128, %p129
      %p131 = scmp.ne.s32.totalorder %s122, %s123
      %p132 = scmp.eq.s32.totalorder %s28, 0
      %p133 = por %p131, %p132
      %p134 = scmp.ne.s32.totalorder %s122, %s123
      %p135 = scmp.eq.s32.totalorder %s29, 1
      %p136 = por %p134, %p135
      %p138 = scmp.ne.s32.totalorder %s123, %s137
      %p139 = scmp.eq.s32.totalorder %s29, 0
      %p140 = por %p138, %p139
      %s142 = sadd.s32 %s141, 1
      %p145 = scmp.eq.s32.totalorder %s23, 1
      %p146 = scmp.ne.s32.totalorder %s141, %s143
      %p147 = scmp.eq.s32.totalorder %s23, 0
      %p148 = por %p146, %p147
      %p149 = scmp.ne.s32.totalorder %s141, %s143
      %p150 = scmp.eq.s32.totalorder %s28, 1
      %p151 = por %p149, %p150
      %p152 = scmp.ne.s32.totalorder %s143, %s144
      %p153 = scmp.eq.s32.totalorder %s28, 0
      %p154 = por %p152, %p153
      %p155 = scmp.ne.s32.totalorder %s143, %s144
      %p156 = scmp.eq.s32.totalorder %s29, 1
      %p157 = por %p155, %p156
      %p159 = scmp.ne.s32.totalorder %s144, %s158
      %p160 = scmp.eq.s32.totalorder %s29, 0
      %p161 = por %p159, %p160
      %s163 = sadd.s32 %s162, 1
      %p166 = scmp.eq.s32.totalorder %s23, 1
      %p167 = scmp.ne.s32.totalorder %s162, %s164
      %p168 = scmp.eq.s32.totalorder %s23, 0
      %p169 = por %p167, %p168
      %p170 = scmp.ne.s32.totalorder %s162, %s164
      %p171 = scmp.eq.s32.totalorder %s28, 1
      %p172 = por %p170, %p171
      %p173 = scmp.ne.s32.totalorder %s164, %s165
      %p174 = scmp.eq.s32.totalorder %s28, 0
      %p175 = por %p173, %p174
      %p176 = scmp.ne.s32.totalorder %s164, %s165
      %p177 = scmp.eq.s32.totalorder %s29, 1
      %p178 = por %p176, %p177
      %p180 = scmp.ne.s32.totalorder %s165, %s179
      %p181 = scmp.eq.s32.totalorder %s29, 0
      %p182 = por %p180, %p181
      %s184 = sadd.s32 %s183, 1
      %p187 = scmp.eq.s32.totalorder %s23, 1
      %p188 = scmp.ne.s32.totalorder %s183, %s185
      %p189 = scmp.eq.s32.totalorder %s23, 0
      %p190 = por %p188, %p189
      %p191 = scmp.ne.s32.totalorder %s183, %s185
      %p192 = scmp.eq.s32.totalorder %s28, 1
      %p193 = por %p191, %p192
      %p194 = scmp.ne.s32.totalorder %s185, %s186
      %p195 = scmp.eq.s32.totalorder %s28, 0
      %p196 = por %p194, %p195
      %p197 = scmp.ne.s32.totalorder %s185, %s186
      %p198 = scmp.eq.s32.totalorder %s29, 1
      %p199 = por %p197, %p198
      %p201 = scmp.ne.s32.totalorder %s186, %s200
      %p202 = scmp.eq.s32.totalorder %s29, 0
      %p203 = por %p201, %p202
      %s205 = sadd.s32 %s204, 1
      %p208 = scmp.eq.s32.totalorder %s23, 1
      %p209 = scmp.ne.s32.totalorder %s204, %s206
      %p210 = scmp.eq.s32.totalorder %s23, 0
      %p211 = por %p209, %p210
      %p212 = scmp.ne.s32.totalorder %s204, %s206
      %p213 = scmp.eq.s32.totalorder %s28, 1
      %p214 = por %p212, %p213
      %p215 = scmp.ne.s32.totalorder %s206, %s207
      %p216 = scmp.eq.s32.totalorder %s28, 0
      %p217 = por %p215, %p216
      %p218 = scmp.ne.s32.totalorder %s206, %s207
      %p219 = scmp.eq.s32.totalorder %s29, 1
      %p220 = por %p218, %p219
      %p222 = scmp.ne.s32.totalorder %s207, %s221
      %p223 = scmp.eq.s32.totalorder %s29, 0
      %p224 = por %p222, %p223
      %s226 = sadd.s32 %s225, 1
      %p229 = scmp.eq.s32.totalorder %s23, 1
      %p230 = scmp.ne.s32.totalorder %s225, %s227
      %p231 = scmp.eq.s32.totalorder %s23, 0
      %p232 = por %p230, %p231
      %p233 = scmp.ne.s32.totalorder %s225, %s227
      %p234 = scmp.eq.s32.totalorder %s28, 1
      %p235 = por %p233, %p234
      %p236 = scmp.ne.s32.totalorder %s227, %s228
      %p237 = scmp.eq.s32.totalorder %s28, 0
      %p238 = por %p236, %p237
      %p239 = scmp.ne.s32.totalorder %s227, %s228
      %p240 = scmp.eq.s32.totalorder %s29, 1
      %p241 = por %p239, %p240
      %p243 = scmp.ne.s32.totalorder %s228, %s242
      %p244 = scmp.eq.s32.totalorder %s29, 0
      %p245 = por %p243, %p244
      %s247 = sadd.s32 %s246, 1
      %p250 = scmp.eq.s32.totalorder %s23, 1
      %p251 = scmp.ne.s32.totalorder %s246, %s248
      %p252 = scmp.eq.s32.totalorder %s23, 0
      %p253 = por %p251, %p252
      %p254 = scmp.ne.s32.totalorder %s246, %s248
      %p255 = scmp.eq.s32.totalorder %s28, 1
      %p256 = por %p254, %p255
      %p257 = scmp.ne.s32.totalorder %s248, %s249
      %p258 = scmp.eq.s32.totalorder %s28, 0
      %p259 = por %p257, %p258
      %p260 = scmp.ne.s32.totalorder %s248, %s249
      %p261 = scmp.eq.s32.totalorder %s29, 1
      %p262 = por %p260, %p261
      %p264 = scmp.ne.s32.totalorder %s249, %s263
      %p265 = scmp.eq.s32.totalorder %s29, 0
      %p266 = por %p264, %p265
      %s268 = sadd.s32 %s267, 1
      %p271 = scmp.eq.s32.totalorder %s23, 1
      %p272 = scmp.ne.s32.totalorder %s267, %s269
      %p273 = scmp.eq.s32.totalorder %s23, 0
      %p274 = por %p272, %p273
      %p275 = scmp.ne.s32.totalorder %s267, %s269
      %p276 = scmp.eq.s32.totalorder %s28, 1
      %p277 = por %p275, %p276
      %p278 = scmp.ne.s32.totalorder %s269, %s270
      %p279 = scmp.eq.s32.totalorder %s28, 0
      %p280 = por %p278, %p279
      %p281 = scmp.ne.s32.totalorder %s269, %s270
      %p282 = scmp.eq.s32.totalorder %s29, 1
      %p283 = por %p281, %p282
      %p285 = scmp.ne.s32.totalorder %s270, %s284
      %p286 = scmp.eq.s32.totalorder %s29, 0
      %p287 = por %p285, %p286
      %s288 = ssub.s32 %s23, %s30
      %p289 = scmp.eq.s32.totalorder %s288, 0
      %s291 = sadd.s32 %s290, 1
      %s292 = scalar_select %p289, %s290, %s291
      %p295 = pneg %p289
      %p296 = scmp.eq.s32.totalorder %s23, 1
      %p297 = por %p295, %p296
      %p298 = scmp.ne.s32.totalorder %s290, %s293
      %p299 = scmp.eq.s32.totalorder %s23, 0
      %p300 = por %p298, %p299
      %p301 = scmp.ne.s32.totalorder %s290, %s293
      %p302 = scmp.eq.s32.totalorder %s28, 1
      %p303 = por %p301, %p302
      %p304 = scmp.ne.s32.totalorder %s293, %s294
      %p305 = scmp.eq.s32.totalorder %s28, 0
      %p306 = por %p304, %p305
      %p307 = scmp.ne.s32.totalorder %s293, %s294
      %p308 = scmp.eq.s32.totalorder %s29, 1
      %p309 = por %p307, %p308
      %p311 = scmp.ne.s32.totalorder %s294, %s310
      %p312 = scmp.eq.s32.totalorder %s29, 0
      %p313 = por %p311, %p312
      %p314 = scmp.le.s32.totalorder 1, %s23
      %p315 = scmp.lt.s32.totalorder %s23, 3
      %p316 = pnand %p314, %p315
      %p317 = pneg %p316
      // Predicated region
      $region9: #{_lambda_.1} parent=5 // pred_check
        _
      $region10: #{_lambda_.1} parent=5 // pred_check_branch
        %319 = sbr.rel (%p316) target = $region12
      $region11: #{_lambda_.1} parent=5 // pred_region
        %s320 = ssub.s32 %s23, 1
        // Predicated region
        $region13: #{_lambda_.1} parent=11 // pred_check
          %p321 = pneg %p70
        $region14: #{_lambda_.1} parent=11 // pred_check_branch
          %323 = sbr.rel (%p321) target = $region16
        $region15: #{_lambda_.1} parent=11 // pred_region
          %s325 = ssub.s32 128, 128
          %326 = vsyncadd [#allocation3], %s325
          %s328 = sshll.u32 [#allocation2], 4
          %s329 = int_to_ptr.vmem [resolvable:$true] %s328
          %331 = dma.hbm_to_vmem [thread:$0]  %s1, 128, %s329, [#allocation3]
        $region16: #{_lambda_.1} parent=11 // pred_fallthru
          _
        // Predicated region
        $region17: #{_lambda_.1} parent=11 // pred_check
          %p332 = pneg %p91
        $region18: #{_lambda_.1} parent=11 // pred_check_branch
          %334 = sbr.rel (%p332) target = $region20
        $region19: #{_lambda_.1} parent=11 // pred_region
          %s336 = ssub.s32 128, 128
          %337 = vsyncadd [#allocation5], %s336
          %s339 = sshll.u32 [#allocation4], 4
          %s340 = int_to_ptr.vmem [resolvable:$true] %s339
          %342 = dma.hbm_to_vmem [thread:$0]  %s2, 128, %s340, [#allocation5]
        $region20: #{_lambda_.1} parent=11 // pred_fallthru
          _
        // Predicated region
        $region21: #{_lambda_.1} parent=11 // pred_check
          %p343 = pneg %p112
        $region22: #{_lambda_.1} parent=11 // pred_check_branch
          %345 = sbr.rel (%p343) target = $region24
        $region23: #{_lambda_.1} parent=11 // pred_region
          %s347 = ssub.s32 64, 64
          %348 = vsyncadd [#allocation5], %s347
          %s350 = sshll.u32 [#allocation6], 4
          %s351 = int_to_ptr.vmem [resolvable:$true] %s350
          %353 = dma.hbm_to_vmem [thread:$0]  %s3, 64, %s351, [#allocation5]
        $region24: #{_lambda_.1} parent=11 // pred_fallthru
          _
        // Predicated region
        $region25: #{_lambda_.1} parent=11 // pred_check
          %p354 = pneg %p133
        $region26: #{_lambda_.1} parent=11 // pred_check_branch
          %356 = sbr.rel (%p354) target = $region28
        $region27: #{_lambda_.1} parent=11 // pred_region
          _
        $region28: #{_lambda_.1} parent=11 // pred_fallthru
          _
        // Predicated region
        $region29: #{_lambda_.1} parent=11 // pred_check
          %p357 = pneg %p154
        $region30: #{_lambda_.1} parent=11 // pred_check_branch
          %359 = sbr.rel (%p357) target = $region32
        $region31: #{_lambda_.1} parent=11 // pred_region
          %s361 = ssub.s32 1024, 1024
          %362 = vsyncadd [#allocation8], %s361
          %s363 = sshll.u32 [#allocation7], 4
          %s364 = int_to_ptr.vmem [resolvable:$true] %s363
          %369 = dma.hbm_to_vmem [thread:$0]  %s5, 1024, %s364, [#allocation8], 64, 64, 4
        $region32: #{_lambda_.1} parent=11 // pred_fallthru
          _
        // Predicated region
        $region33: #{_lambda_.1} parent=11 // pred_check
          %p370 = pneg %p175
        $region34: #{_lambda_.1} parent=11 // pred_check_branch
          %372 = sbr.rel (%p370) target = $region36
        $region35: #{_lambda_.1} parent=11 // pred_region
          %s374 = ssub.s32 1536, 1536
          %375 = vsyncadd [#allocation8], %s374
          %s376 = sshll.u32 [#allocation9], 4
          %s377 = int_to_ptr.vmem [resolvable:$true] %s376
          %382 = dma.hbm_to_vmem [thread:$0]  %s6, 1536, %s377, [#allocation8], 128, 128, 8
        $region36: #{_lambda_.1} parent=11 // pred_fallthru
          _
        // Predicated region
        $region37: #{_lambda_.1} parent=11 // pred_check
          %p383 = pneg %p196
        $region38: #{_lambda_.1} parent=11 // pred_check_branch
          %385 = sbr.rel (%p383) target = $region40
        $region39: #{_lambda_.1} parent=11 // pred_region
          _
        $region40: #{_lambda_.1} parent=11 // pred_fallthru
          _
        // Predicated region
        $region41: #{_lambda_.1} parent=11 // pred_check
          %p386 = pneg %p217
        $region42: #{_lambda_.1} parent=11 // pred_check_branch
          %388 = sbr.rel (%p386) target = $region44
        $region43: #{_lambda_.1} parent=11 // pred_region
          %s390 = ssub.s32 768, 768
          %391 = vsyncadd [#allocation11], %s390
          %s392 = sshll.u32 [#allocation10], 4
          %s393 = int_to_ptr.vmem [resolvable:$true] %s392
          %398 = dma.hbm_to_vmem [thread:$0]  %s8, 768, %s393, [#allocation11], 64, 64, 4
        $region44: #{_lambda_.1} parent=11 // pred_fallthru
          _
        // Predicated region
        $region45: #{_lambda_.1} parent=11 // pred_check
          %p399 = pneg %p238
        $region46: #{_lambda_.1} parent=11 // pred_check_branch
          %401 = sbr.rel (%p399) target = $region48
        $region47: #{_lambda_.1} parent=11 // pred_region
          %s403 = ssub.s32 512, 512
          %404 = vsyncadd [#allocation11], %s403
          %s405 = sshll.u32 [#allocation12], 4
          %s406 = int_to_ptr.vmem [resolvable:$true] %s405
          %411 = dma.hbm_to_vmem [thread:$0]  %s9, 512, %s406, [#allocation11], 128, 128, 8
        $region48: #{_lambda_.1} parent=11 // pred_fallthru
          _
        // Predicated region
        $region49: #{_lambda_.1} parent=11 // pred_check
          %p412 = pneg %p259
        $region50: #{_lambda_.1} parent=11 // pred_check_branch
          %414 = sbr.rel (%p412) target = $region52
        $region51: #{_lambda_.1} parent=11 // pred_region
          %s416 = ssub.s32 192, 192
          %417 = vsyncadd [#allocation14], %s416
          %s418 = sshll.u32 [#allocation13], 4
          %s419 = int_to_ptr.vmem [resolvable:$true] %s418
          %424 = dma.hbm_to_vmem [thread:$0]  %s10, 192, %s419, [#allocation14], 64, 64, 4
        $region52: #{_lambda_.1} parent=11 // pred_fallthru
          _
        // Predicated region
        $region53: #{_lambda_.1} parent=11 // pred_check
          %p425 = pneg %p280
        $region54: #{_lambda_.1} parent=11 // pred_check_branch
          %427 = sbr.rel (%p425) target = $region56
        $region55: #{_lambda_.1} parent=11 // pred_region
          %s429 = ssub.s32 128, 128
          %430 = vsyncadd [#allocation14], %s429
          %s432 = sshll.u32 [#allocation15], 4
          %s433 = int_to_ptr.vmem [resolvable:$true] %s432
          %435 = dma.hbm_to_vmem [thread:$0]  %s11, 128, %s433, [#allocation14]
        $region56: #{_lambda_.1} parent=11 // pred_fallthru
          _
      $region12: #{_lambda_.1} parent=5 // pred_fallthru
        _
      %p436 = scmp.lt.s32.totalorder %s23, 2
      // Predicated region
      $region57: #{_lambda_.1} parent=5 // pred_check
        %p437 = pneg %p436
      $region58: #{_lambda_.1} parent=5 // pred_check_branch
        %439 = sbr.rel (%p437) target = $region60
      $region59: #{_lambda_.1} parent=5 // pred_region
        // Predicated region
        $region61: #{_lambda_.1} parent=59 // pred_check
          %p440 = pneg %p43
        $region62: #{_lambda_.1} parent=59 // pred_check_branch
          %442 = sbr.rel (%p440) target = $region64
        $region63: #{_lambda_.1} parent=59 // pred_region
          %p443 = scmp.lt.s32.totalorder %s23, 1
          %s444 = scalar_select %p443, %s23, 1
          %s445 = smul.addr %s444, 8
          %s446 = scalar_lea.vmem %s0, %s445
        $region64: #{_lambda_.1} parent=59 // pred_fallthru
          _
      $region60: #{_lambda_.1} parent=5 // pred_fallthru
        _
      %p447 = scmp.le.s32.totalorder 1, %s23
      %p448 = scmp.lt.s32.totalorder %s23, 3
      %p449 = pnand %p447, %p448
      %p450 = pneg %p449
      // Predicated region
      $region65: #{_lambda_.1} parent=5 // pred_check
        _
      $region66: #{_lambda_.1} parent=5 // pred_check_branch
        %452 = sbr.rel (%p449) target = $region68
      $region67: #{_lambda_.1} parent=5 // pred_region
        %s453 = ssub.s32 %s23, 1
        // Predicated region
        $region69: #{_lambda_.1} parent=67 // pred_check
          %p454 = pneg %p70
        $region70: #{_lambda_.1} parent=67 // pred_check_branch
          %456 = sbr.rel (%p454) target = $region72
        $region71: #{_lambda_.1} parent=67 // pred_region
          %457 = dma.done [#allocation3], 128
        $region72: #{_lambda_.1} parent=67 // pred_fallthru
          _
        // Predicated region
        $region73: #{_lambda_.1} parent=67 // pred_check
          %p458 = pneg %p91
        $region74: #{_lambda_.1} parent=67 // pred_check_branch
          %460 = sbr.rel (%p458) target = $region76
        $region75: #{_lambda_.1} parent=67 // pred_region
          %461 = dma.done [#allocation5], 128
        $region76: #{_lambda_.1} parent=67 // pred_fallthru
          _
        // Predicated region
        $region77: #{_lambda_.1} parent=67 // pred_check
          %p462 = pneg %p112
        $region78: #{_lambda_.1} parent=67 // pred_check_branch
          %464 = sbr.rel (%p462) target = $region80
        $region79: #{_lambda_.1} parent=67 // pred_region
          %465 = dma.done [#allocation5], 64
        $region80: #{_lambda_.1} parent=67 // pred_fallthru
          _
        // Predicated region
        $region81: #{_lambda_.1} parent=67 // pred_check
          %p466 = pneg %p154
        $region82: #{_lambda_.1} parent=67 // pred_check_branch
          %468 = sbr.rel (%p466) target = $region84
        $region83: #{_lambda_.1} parent=67 // pred_region
          %469 = dma.done [#allocation8], 1024
        $region84: #{_lambda_.1} parent=67 // pred_fallthru
          _
        // Predicated region
        $region85: #{_lambda_.1} parent=67 // pred_check
          %p470 = pneg %p175
        $region86: #{_lambda_.1} parent=67 // pred_check_branch
          %472 = sbr.rel (%p470) target = $region88
        $region87: #{_lambda_.1} parent=67 // pred_region
          %473 = dma.done [#allocation8], 1536
        $region88: #{_lambda_.1} parent=67 // pred_fallthru
          _
        // Predicated region
        $region89: #{_lambda_.1} parent=67 // pred_check
          %p474 = pneg %p217
        $region90: #{_lambda_.1} parent=67 // pred_check_branch
          %476 = sbr.rel (%p474) target = $region92
        $region91: #{_lambda_.1} parent=67 // pred_region
          %477 = dma.done [#allocation11], 768
        $region92: #{_lambda_.1} parent=67 // pred_fallthru
          _
        // Predicated region
        $region93: #{_lambda_.1} parent=67 // pred_check
          %p478 = pneg %p238
        $region94: #{_lambda_.1} parent=67 // pred_check_branch
          %480 = sbr.rel (%p478) target = $region96
        $region95: #{_lambda_.1} parent=67 // pred_region
          %481 = dma.done [#allocation11], 512
        $region96: #{_lambda_.1} parent=67 // pred_fallthru
          _
        // Predicated region
        $region97: #{_lambda_.1} parent=67 // pred_check
          %p482 = pneg %p259
        $region98: #{_lambda_.1} parent=67 // pred_check_branch
          %484 = sbr.rel (%p482) target = $region100
        $region99: #{_lambda_.1} parent=67 // pred_region
          %485 = dma.done [#allocation14], 192
        $region100: #{_lambda_.1} parent=67 // pred_fallthru
          _
        // Predicated region
        $region101: #{_lambda_.1} parent=67 // pred_check
          %p486 = pneg %p280
        $region102: #{_lambda_.1} parent=67 // pred_check_branch
          %488 = sbr.rel (%p486) target = $region104
        $region103: #{_lambda_.1} parent=67 // pred_region
          %489 = dma.done [#allocation14], 128
        $region104: #{_lambda_.1} parent=67 // pred_fallthru
          _
        %p490 = scmp.lt.s32.totalorder %s28, 1
        %s491 = scalar_select %p490, %s28, 1
        %s492 = smul.addr %s491, 8
        %s493 = scalar_lea.vmem %s0, %s492
        %p494 = pneg %p49
        %p495 = pneg %p46
        %p496 = pneg %p70
        %p497 = pneg %p67
        %p498 = pneg %p91
        %p499 = pneg %p88
        %p500 = pneg %p112
        %p501 = pneg %p109
        %p502 = pneg %p133
        %p503 = pneg %p130
        %p504 = pneg %p154
        %p505 = pneg %p151
        %p506 = pneg %p175
        %p507 = pneg %p172
        %p508 = pneg %p196
        %p509 = pneg %p193
        %p510 = pneg %p217
        %p511 = pneg %p214
        %p512 = pneg %p238
        %p513 = pneg %p235
        %p514 = pneg %p259
        %p515 = pneg %p256
        %p516 = pneg %p280
        %p517 = pneg %p277
        %p518 = pneg %p306
        %p519 = pneg %p303
        %p520 = scmp.lt.s32.totalorder %s28, 1
        %s521 = scalar_select %p520, %s28, 1
        %s522 = smul.addr %s521, 8
        %s523 = scalar_lea.vmem %s12, %s522
        %p524 = scmp.lt.s32.totalorder %s28, 1
        %s525 = scalar_select %p524, %s28, 1
        %s526 = smul.addr %s525, 8
        %s527 = scalar_lea.vmem %s0, %s526
        %p528 = scmp.lt.s32.totalorder %s28, 1
        %s529 = scalar_select %p528, %s28, 1
        %s530 = smul.addr %s529, 8
        %s531 = scalar_lea.vmem %s12, %s530
        %v533 = vlaneseq
        %v534 = vand.u32 %v533, 127
        %vm535 = vcmp.lt.s32.totalorder %v534, 96
        %v536 = vld [vmem:[%s527] sm:$0xff]
        %v537 = vld [vmem:[#allocation2] sm:$0xff]
        %vm538 = vcmask 64512
        %v540 = vsel %vm538, %v536, 0
        %542 = vmatprep.subr.mxu0 0.0
        %543 = vmatpush1.msra.mxu0 %v537
        %544 = vmatprep.subr.mxu0 0.0
        %545 = vmatpush1.msra.mxu0 0.0
        %546 = vmatprep.subr.mxu0 0.0
        %547 = vmatpush1.msra.mxu0 0.0
        %548 = vmatprep.subr.mxu0 0.0
        %549 = vmatpush1.msra.mxu0 0.0
        %550 = vmatprep.subr.mxu0 0.0
        %551 = vmatpush1.msra.mxu0 0.0
        %552 = vmatprep.subr.mxu0 0.0
        %553 = vmatpush1.msra.mxu0 0.0
        %554 = vmatprep.subr.mxu0 0.0
        %555 = vmatpush1.msra.mxu0 0.0
        %556 = vmatprep.subr.mxu0 0.0
        %557 = vmatpush1.msra.mxu0 0.0
        %558 = vmatprep.subr.mxu0 0.0
        %559 = vmatpush1.msra.mxu0 0.0
        %560 = vmatprep.subr.mxu0 0.0
        %561 = vmatpush1.msra.mxu0 0.0
        %562 = vmatprep.subr.mxu0 0.0
        %563 = vmatpush1.msra.mxu0 0.0
        %564 = vmatprep.subr.mxu0 0.0
        %565 = vmatpush1.msra.mxu0 0.0
        %566 = vmatprep.subr.mxu0 0.0
        %567 = vmatpush1.msra.mxu0 0.0
        %568 = vmatprep.subr.mxu0 0.0
        %569 = vmatpush1.msra.mxu0 0.0
        %570 = vmatprep.subr.mxu0 0.0
        %571 = vmatpush1.msra.mxu0 0.0
        %572 = vmatprep.subr.mxu0 0.0
        %573 = vmatpush1.msra.mxu0 0.0
        %574 = vmatprep.subr.mxu0 0.0
        %575 = vmatpush1.msra.mxu0 0.0
        %576 = vmatprep.subr.mxu0 0.0
        %577 = vmatpush1.msra.mxu0 0.0
        %578 = vmatprep.subr.mxu0 0.0
        %579 = vmatpush1.msra.mxu0 0.0
        %580 = vmatprep.subr.mxu0 0.0
        %581 = vmatpush1.msra.mxu0 0.0
        %582 = vmatprep.subr.mxu0 0.0
        %583 = vmatpush1.msra.mxu0 0.0
        %584 = vmatprep.subr.mxu0 0.0
        %585 = vmatpush1.msra.mxu0 0.0
        %586 = vmatprep.subr.mxu0 0.0
        %587 = vmatpush1.msra.mxu0 0.0
        %588 = vmatprep.subr.mxu0 0.0
        %589 = vmatpush1.msra.mxu0 0.0
        %590 = vmatprep.subr.mxu0 0.0
        %591 = vmatpush1.msra.mxu0 0.0
        %592 = vmatprep.subr.mxu0 0.0
        %593 = vmatpush1.msra.mxu0 0.0
        %594 = vmatprep.subr.mxu0 0.0
        %595 = vmatpush1.msra.mxu0 0.0
        %596 = vmatprep.subr.mxu0 0.0
        %597 = vmatpush1.msra.mxu0 0.0
        %598 = vmatprep.subr.mxu0 0.0
        %599 = vmatpush1.msra.mxu0 0.0
        %600 = vmatprep.subr.mxu0 0.0
        %601 = vmatpush1.msra.mxu0 0.0
        %602 = vmatprep.subr.mxu0 0.0
        %603 = vmatpush1.msra.mxu0 0.0
        %604 = vmatprep.subr.mxu0 0.0
        %605 = vmatpush1.msra.mxu0 0.0
        %606 = vmatprep.mubr.f32.mxu0 0.0
        %607 = vmatmul.mubr.f32.gmra.mrb[0].mxu0 %v540
        %v608 = vpop.f32.mrb[0].mxu0
        %v609 = vadd.f32 0.0, %v608
        %v610 = vpop.f32.mrb[0].mxu0
        %611 = vdwg.mxu0
        %v612 = vld [vmem:[#allocation4] sm:$0xff]
        %613 = vmatprep.subr.mxu0 0.0
        %614 = vmatpush1.msra.mxu0 %v612
        %615 = vmatprep.subr.mxu0 0.0
        %616 = vmatpush1.msra.mxu0 0.0
        %617 = vmatprep.subr.mxu0 0.0
        %618 = vmatpush1.msra.mxu0 0.0
        %619 = vmatprep.subr.mxu0 0.0
        %620 = vmatpush1.msra.mxu0 0.0
        %621 = vmatprep.subr.mxu0 0.0
        %622 = vmatpush1.msra.mxu0 0.0
        %623 = vmatprep.subr.mxu0 0.0
        %624 = vmatpush1.msra.mxu0 0.0
        %625 = vmatprep.subr.mxu0 0.0
        %626 = vmatpush1.msra.mxu0 0.0
        %627 = vmatprep.subr.mxu0 0.0
        %628 = vmatpush1.msra.mxu0 0.0
        %629 = vmatprep.subr.mxu0 0.0
        %630 = vmatpush1.msra.mxu0 0.0
        %631 = vmatprep.subr.mxu0 0.0
        %632 = vmatpush1.msra.mxu0 0.0
        %633 = vmatprep.subr.mxu0 0.0
        %634 = vmatpush1.msra.mxu0 0.0
        %635 = vmatprep.subr.mxu0 0.0
        %636 = vmatpush1.msra.mxu0 0.0
        %637 = vmatprep.subr.mxu0 0.0
        %638 = vmatpush1.msra.mxu0 0.0
        %639 = vmatprep.subr.mxu0 0.0
        %640 = vmatpush1.msra.mxu0 0.0
        %641 = vmatprep.subr.mxu0 0.0
        %642 = vmatpush1.msra.mxu0 0.0
        %643 = vmatprep.subr.mxu0 0.0
        %644 = vmatpush1.msra.mxu0 0.0
        %645 = vmatprep.subr.mxu0 0.0
        %646 = vmatpush1.msra.mxu0 0.0
        %647 = vmatprep.subr.mxu0 0.0
        %648 = vmatpush1.msra.mxu0 0.0
        %649 = vmatprep.subr.mxu0 0.0
        %650 = vmatpush1.msra.mxu0 0.0
        %651 = vmatprep.subr.mxu0 0.0
        %652 = vmatpush1.msra.mxu0 0.0
        %653 = vmatprep.subr.mxu0 0.0
        %654 = vmatpush1.msra.mxu0 0.0
        %655 = vmatprep.subr.mxu0 0.0
        %656 = vmatpush1.msra.mxu0 0.0
        %657 = vmatprep.subr.mxu0 0.0
        %658 = vmatpush1.msra.mxu0 0.0
        %659 = vmatprep.subr.mxu0 0.0
        %660 = vmatpush1.msra.mxu0 0.0
        %661 = vmatprep.subr.mxu0 0.0
        %662 = vmatpush1.msra.mxu0 0.0
        %663 = vmatprep.subr.mxu0 0.0
        %664 = vmatpush1.msra.mxu0 0.0
        %665 = vmatprep.subr.mxu0 0.0
        %666 = vmatpush1.msra.mxu0 0.0
        %667 = vmatprep.subr.mxu0 0.0
        %668 = vmatpush1.msra.mxu0 0.0
        %669 = vmatprep.subr.mxu0 0.0
        %670 = vmatpush1.msra.mxu0 0.0
        %671 = vmatprep.subr.mxu0 0.0
        %672 = vmatpush1.msra.mxu0 0.0
        %673 = vmatprep.subr.mxu0 0.0
        %674 = vmatpush1.msra.mxu0 0.0
        %675 = vmatprep.subr.mxu0 0.0
        %676 = vmatpush1.msra.mxu0 0.0
        %677 = vmatprep.mubr.f32.mxu0 0.0
        %678 = vmatmul.mubr.f32.gmra.mrb[0].mxu0 %v540
        %v679 = vpop.f32.mrb[0].mxu0
        %v680 = vadd.f32 0.0, %v679
        %v681 = vpop.f32.mrb[0].mxu0
        %682 = vdwg.mxu0
        %v683 = vld [vmem:[#allocation9] sm:$0xff]
        %v684 = vld [vmem:[#allocation9 + $0x8] sm:$0xff]
        %v685 = vld [vmem:[#allocation9 + $0x10] sm:$0xff]
        %v686 = vld [vmem:[#allocation9 + $0x18] sm:$0xff]
        %s687 = scalar_lea.vmem [#allocation9], 32
        %v688 = vld [vmem:[%s687] sm:$0xff]
        %v689 = vld [vmem:[%s687 + $0x8] sm:$0xff]
        %v690 = vld [vmem:[%s687 + $0x10] sm:$0xff]
        %v691 = vld [vmem:[%s687 + $0x18] sm:$0xff]
        %v693 = vsel %vm538, %v688, 0
        %v696 = vsel %vm538, %v689, 0
        %v699 = vsel %vm538, %v690, 0
        %v702 = vsel %vm538, %v691, 0
        %704 = vmatprep.subr.mxu0 0.0
        %705 = vmatpush1.msra.mxu0 %v609
        %706 = vmatprep.subr.mxu0 0.0
        %707 = vmatpush1.msra.mxu0 0.0
        %708 = vmatprep.subr.mxu0 0.0
        %709 = vmatpush1.msra.mxu0 0.0
        %710 = vmatprep.subr.mxu0 0.0
        %711 = vmatpush1.msra.mxu0 0.0
        %712 = vmatprep.subr.mxu0 0.0
        %713 = vmatpush1.msra.mxu0 0.0
        %714 = vmatprep.subr.mxu0 0.0
        %715 = vmatpush1.msra.mxu0 0.0
        %716 = vmatprep.subr.mxu0 0.0
        %717 = vmatpush1.msra.mxu0 0.0
        %718 = vmatprep.subr.mxu0 0.0
        %719 = vmatpush1.msra.mxu0 0.0
        %720 = vmatprep.subr.mxu0 0.0
        %721 = vmatpush1.msra.mxu0 0.0
        %722 = vmatprep.subr.mxu0 0.0
        %723 = vmatpush1.msra.mxu0 0.0
        %724 = vmatprep.subr.mxu0 0.0
        %725 = vmatpush1.msra.mxu0 0.0
        %726 = vmatprep.subr.mxu0 0.0
        %727 = vmatpush1.msra.mxu0 0.0
        %728 = vmatprep.subr.mxu0 0.0
        %729 = vmatpush1.msra.mxu0 0.0
        %730 = vmatprep.subr.mxu0 0.0
        %731 = vmatpush1.msra.mxu0 0.0
        %732 = vmatprep.subr.mxu0 0.0
        %733 = vmatpush1.msra.mxu0 0.0
        %734 = vmatprep.subr.mxu0 0.0
        %735 = vmatpush1.msra.mxu0 0.0
        %736 = vmatprep.subr.mxu0 0.0
        %737 = vmatpush1.msra.mxu0 0.0
        %738 = vmatprep.subr.mxu0 0.0
        %739 = vmatpush1.msra.mxu0 0.0
        %740 = vmatprep.subr.mxu0 0.0
        %741 = vmatpush1.msra.mxu0 0.0
        %742 = vmatprep.subr.mxu0 0.0
        %743 = vmatpush1.msra.mxu0 0.0
        %744 = vmatprep.subr.mxu0 0.0
        %745 = vmatpush1.msra.mxu0 0.0
        %746 = vmatprep.subr.mxu0 0.0
        %747 = vmatpush1.msra.mxu0 0.0
        %748 = vmatprep.subr.mxu0 0.0
        %749 = vmatpush1.msra.mxu0 0.0
        %750 = vmatprep.subr.mxu0 0.0
        %751 = vmatpush1.msra.mxu0 0.0
        %752 = vmatprep.subr.mxu0 0.0
        %753 = vmatpush1.msra.mxu0 0.0
        %754 = vmatprep.subr.mxu0 0.0
        %755 = vmatpush1.msra.mxu0 0.0
        %756 = vmatprep.subr.mxu0 0.0
        %757 = vmatpush1.msra.mxu0 0.0
        %758 = vmatprep.subr.mxu0 0.0
        %759 = vmatpush1.msra.mxu0 0.0
        %760 = vmatprep.subr.mxu0 0.0
        %761 = vmatpush1.msra.mxu0 0.0
        %762 = vmatprep.subr.mxu0 0.0
        %763 = vmatpush1.msra.mxu0 0.0
        %764 = vmatprep.subr.mxu0 0.0
        %765 = vmatpush1.msra.mxu0 0.0
        %766 = vmatprep.subr.mxu0 0.0
        %767 = vmatpush1.msra.mxu0 0.0
        %768 = vmatprep.mubr.f32.mxu0 0.0
        %769 = vmatmul.mubr.f32.gmra.mrb[0].mxu0 %v693
        %v770 = vpop.f32.mrb[0].mxu0
        %v771 = vadd.f32 0.0, %v770
        %v772 = vpop.f32.mrb[0].mxu0
        %773 = vmatprep.mubr.f32.mxu0 0.0
        %774 = vmatmul.mubr.f32.gmra.mrb[0].mxu0 %v696
        %v775 = vpop.f32.mrb[0].mxu0
        %v776 = vadd.f32 0.0, %v775
        %v777 = vpop.f32.mrb[0].mxu0
        %778 = vmatprep.mubr.f32.mxu0 0.0
        %779 = vmatmul.mubr.f32.gmra.mrb[0].mxu0 %v699
        %v780 = vpop.f32.mrb[0].mxu0
        %v781 = vadd.f32 0.0, %v780
        %v782 = vpop.f32.mrb[0].mxu0
        %783 = vmatprep.mubr.f32.mxu0 0.0
        %784 = vmatmul.mubr.f32.gmra.mrb[0].mxu0 %v702
        %v785 = vpop.f32.mrb[0].mxu0
        %v786 = vadd.f32 0.0, %v785
        %v787 = vpop.f32.mrb[0].mxu0
        %788 = vdwg.mxu0
        %v790 = vsel %vm538, %v683, 0
        %v793 = vsel %vm538, %v684, 0
        %v796 = vsel %vm538, %v685, 0
        %v799 = vsel %vm538, %v686, 0
        %801 = vmatprep.subr.mxu0 0.0
        %802 = vmatpush1.msra.mxu0 %v536
        %803 = vmatprep.subr.mxu0 0.0
        %804 = vmatpush1.msra.mxu0 0.0
        %805 = vmatprep.subr.mxu0 0.0
        %806 = vmatpush1.msra.mxu0 0.0
        %807 = vmatprep.subr.mxu0 0.0
        %808 = vmatpush1.msra.mxu0 0.0
        %809 = vmatprep.subr.mxu0 0.0
        %810 = vmatpush1.msra.mxu0 0.0
        %811 = vmatprep.subr.mxu0 0.0
        %812 = vmatpush1.msra.mxu0 0.0
        %813 = vmatprep.subr.mxu0 0.0
        %814 = vmatpush1.msra.mxu0 0.0
        %815 = vmatprep.subr.mxu0 0.0
        %816 = vmatpush1.msra.mxu0 0.0
        %817 = vmatprep.subr.mxu0 0.0
        %818 = vmatpush1.msra.mxu0 0.0
        %819 = vmatprep.subr.mxu0 0.0
        %820 = vmatpush1.msra.mxu0 0.0
        %821 = vmatprep.subr.mxu0 0.0
        %822 = vmatpush1.msra.mxu0 0.0
        %823 = vmatprep.subr.mxu0 0.0
        %824 = vmatpush1.msra.mxu0 0.0
        %825 = vmatprep.subr.mxu0 0.0
        %826 = vmatpush1.msra.mxu0 0.0
        %827 = vmatprep.subr.mxu0 0.0
        %828 = vmatpush1.msra.mxu0 0.0
        %829 = vmatprep.subr.mxu0 0.0
        %830 = vmatpush1.msra.mxu0 0.0
        %831 = vmatprep.subr.mxu0 0.0
        %832 = vmatpush1.msra.mxu0 0.0
        %833 = vmatprep.subr.mxu0 0.0
        %834 = vmatpush1.msra.mxu0 0.0
        %835 = vmatprep.subr.mxu0 0.0
        %836 = vmatpush1.msra.mxu0 0.0
        %837 = vmatprep.subr.mxu0 0.0
        %838 = vmatpush1.msra.mxu0 0.0
        %839 = vmatprep.subr.mxu0 0.0
        %840 = vmatpush1.msra.mxu0 0.0
        %841 = vmatprep.subr.mxu0 0.0
        %842 = vmatpush1.msra.mxu0 0.0
        %843 = vmatprep.subr.mxu0 0.0
        %844 = vmatpush1.msra.mxu0 0.0
        %845 = vmatprep.subr.mxu0 0.0
        %846 = vmatpush1.msra.mxu0 0.0
        %847 = vmatprep.subr.mxu0 0.0
        %848 = vmatpush1.msra.mxu0 0.0
        %849 = vmatprep.subr.mxu0 0.0
        %850 = vmatpush1.msra.mxu0 0.0
        %851 = vmatprep.subr.mxu0 0.0
        %852 = vmatpush1.msra.mxu0 0.0
        %853 = vmatprep.subr.mxu0 0.0
        %854 = vmatpush1.msra.mxu0 0.0
        %855 = vmatprep.subr.mxu0 0.0
        %856 = vmatpush1.msra.mxu0 0.0
        %857 = vmatprep.subr.mxu0 0.0
        %858 = vmatpush1.msra.mxu0 0.0
        %859 = vmatprep.subr.mxu0 0.0
        %860 = vmatpush1.msra.mxu0 0.0
        %861 = vmatprep.subr.mxu0 0.0
        %862 = vmatpush1.msra.mxu0 0.0
        %863 = vmatprep.subr.mxu0 0.0
        %864 = vmatpush1.msra.mxu0 0.0
        %865 = vmatprep.mubr.f32.mxu0 0.0
        %866 = vmatmul.mubr.f32.gmra.mrb[0].mxu0 %v790
        %v867 = vpop.f32.mrb[0].mxu0
        %v868 = vadd.f32 %v771, %v867
        %v869 = vpop.f32.mrb[0].mxu0
        %870 = vmatprep.mubr.f32.mxu0 0.0
        %871 = vmatmul.mubr.f32.gmra.mrb[0].mxu0 %v793
        %v872 = vpop.f32.mrb[0].mxu0
        %v873 = vadd.f32 %v776, %v872
        %v874 = vpop.f32.mrb[0].mxu0
        %875 = vmatprep.mubr.f32.mxu0 0.0
        %876 = vmatmul.mubr.f32.gmra.mrb[0].mxu0 %v796
        %v877 = vpop.f32.mrb[0].mxu0
        %v878 = vadd.f32 %v781, %v877
        %v879 = vpop.f32.mrb[0].mxu0
        %880 = vmatprep.mubr.f32.mxu0 0.0
        %881 = vmatmul.mubr.f32.gmra.mrb[0].mxu0 %v799
        %v882 = vpop.f32.mrb[0].mxu0
        %v883 = vadd.f32 %v786, %v882
        %v884 = vpop.f32.mrb[0].mxu0
        %885 = vdwg.mxu0
        %s886 = scalar_lea.vmem [#allocation9], 64
        %v887 = vld [vmem:[%s886] sm:$0xff]
        %v888 = vld [vmem:[%s886 + $0x8] sm:$0xff]
        %v889 = vld [vmem:[%s886 + $0x10] sm:$0xff]
        %v890 = vld [vmem:[%s886 + $0x18] sm:$0xff]
        %v892 = vsel %vm538, %v887, 0
        %v895 = vsel %vm538, %v888, 0
        %v898 = vsel %vm538, %v889, 0
        %v901 = vsel %vm538, %v890, 0
        %903 = vmatprep.subr.mxu0 0.0
        %904 = vmatpush1.msra.mxu0 %v680
        %905 = vmatprep.subr.mxu0 0.0
        %906 = vmatpush1.msra.mxu0 0.0
        %907 = vmatprep.subr.mxu0 0.0
        %908 = vmatpush1.msra.mxu0 0.0
        %909 = vmatprep.subr.mxu0 0.0
        %910 = vmatpush1.msra.mxu0 0.0
        %911 = vmatprep.subr.mxu0 0.0
        %912 = vmatpush1.msra.mxu0 0.0
        %913 = vmatprep.subr.mxu0 0.0
        %914 = vmatpush1.msra.mxu0 0.0
        %915 = vmatprep.subr.mxu0 0.0
        %916 = vmatpush1.msra.mxu0 0.0
        %917 = vmatprep.subr.mxu0 0.0
        %918 = vmatpush1.msra.mxu0 0.0
        %919 = vmatprep.subr.mxu0 0.0
        %920 = vmatpush1.msra.mxu0 0.0
        %921 = vmatprep.subr.mxu0 0.0
        %922 = vmatpush1.msra.mxu0 0.0
        %923 = vmatprep.subr.mxu0 0.0
        %924 = vmatpush1.msra.mxu0 0.0
        %925 = vmatprep.subr.mxu0 0.0
        %926 = vmatpush1.msra.mxu0 0.0
        %927 = vmatprep.subr.mxu0 0.0
        %928 = vmatpush1.msra.mxu0 0.0
        %929 = vmatprep.subr.mxu0 0.0
        %930 = vmatpush1.msra.mxu0 0.0
        %931 = vmatprep.subr.mxu0 0.0
        %932 = vmatpush1.msra.mxu0 0.0
        %933 = vmatprep.subr.mxu0 0.0
        %934 = vmatpush1.msra.mxu0 0.0
        %935 = vmatprep.subr.mxu0 0.0
        %936 = vmatpush1.msra.mxu0 0.0
        %937 = vmatprep.subr.mxu0 0.0
        %938 = vmatpush1.msra.mxu0 0.0
        %939 = vmatprep.subr.mxu0 0.0
        %940 = vmatpush1.msra.mxu0 0.0
        %941 = vmatprep.subr.mxu0 0.0
        %942 = vmatpush1.msra.mxu0 0.0
        %943 = vmatprep.subr.mxu0 0.0
        %944 = vmatpush1.msra.mxu0 0.0
        %945 = vmatprep.subr.mxu0 0.0
        %946 = vmatpush1.msra.mxu0 0.0
        %947 = vmatprep.subr.mxu0 0.0
        %948 = vmatpush1.msra.mxu0 0.0
        %949 = vmatprep.subr.mxu0 0.0
        %950 = vmatpush1.msra.mxu0 0.0
        %951 = vmatprep.subr.mxu0 0.0
        %952 = vmatpush1.msra.mxu0 0.0
        %953 = vmatprep.subr.mxu0 0.0
        %954 = vmatpush1.msra.mxu0 0.0
        %955 = vmatprep.subr.mxu0 0.0
        %956 = vmatpush1.msra.mxu0 0.0
        %957 = vmatprep.subr.mxu0 0.0
        %958 = vmatpush1.msra.mxu0 0.0
        %959 = vmatprep.subr.mxu0 0.0
        %960 = vmatpush1.msra.mxu0 0.0
        %961 = vmatprep.subr.mxu0 0.0
        %962 = vmatpush1.msra.mxu0 0.0
        %963 = vmatprep.subr.mxu0 0.0
        %964 = vmatpush1.msra.mxu0 0.0
        %965 = vmatprep.subr.mxu0 0.0
        %966 = vmatpush1.msra.mxu0 0.0
        %967 = vmatprep.mubr.f32.mxu0 0.0
        %968 = vmatmul.mubr.f32.gmra.mrb[0].mxu0 %v892
        %v969 = vpop.f32.mrb[0].mxu0
        %v970 = vadd.f32 0.0, %v969
        %v971 = vpop.f32.mrb[0].mxu0
        %972 = vmatprep.mubr.f32.mxu0 0.0
        %973 = vmatmul.mubr.f32.gmra.mrb[0].mxu0 %v895
        %v974 = vpop.f32.mrb[0].mxu0
        %v975 = vadd.f32 0.0, %v974
        %v976 = vpop.f32.mrb[0].mxu0
        %977 = vmatprep.mubr.f32.mxu0 0.0
        %978 = vmatmul.mubr.f32.gmra.mrb[0].mxu0 %v898
        %v979 = vpop.f32.mrb[0].mxu0
        %v980 = vadd.f32 0.0, %v979
        %v981 = vpop.f32.mrb[0].mxu0
        %982 = vmatprep.mubr.f32.mxu0 0.0
        %983 = vmatmul.mubr.f32.gmra.mrb[0].mxu0 %v901
        %v984 = vpop.f32.mrb[0].mxu0
        %v985 = vadd.f32 0.0, %v984
        %v986 = vpop.f32.mrb[0].mxu0
        %987 = vdwg.mxu0
        %v988 = vadd.f32 %v868, %v970
        %v989 = vadd.f32 %v873, %v975
        %v990 = vadd.f32 %v878, %v980
        %v991 = vadd.f32 %v883, %v985
        %v992 = vld [vmem:[%s7] sm:$0xff]
        %v993 = vld [vmem:[%s7 + $0x8] sm:$0xff]
        %v994 = vld [vmem:[%s7 + $0x10] sm:$0xff]
        %v995 = vld [vmem:[%s7 + $0x18] sm:$0xff]
        %997 = vset.pattern.permute.xlu0 0
        %998 = vperm.xlu0 %997, %v992
        %v999 = vpop.permute.xlu0 %998
        %1002 = vset.pattern.permute.xlu0 0
        %1003 = vperm.xlu0 %1002, %v993
        %v1004 = vpop.permute.xlu0 %1003
        %1007 = vset.pattern.permute.xlu0 0
        %1008 = vperm.xlu0 %1007, %v994
        %v1009 = vpop.permute.xlu0 %1008
        %1012 = vset.pattern.permute.xlu0 0
        %1013 = vperm.xlu0 %1012, %v995
        %v1014 = vpop.permute.xlu0 %1013
        %v1016 = vadd.f32 %v988, %v999
        %v1017 = vadd.f32 %v989, %v1004
        %v1018 = vadd.f32 %v990, %v1009
        %v1019 = vadd.f32 %v991, %v1014
        %v1020 = vmax.f32 %v1016, 0.0
        %v1021 = vmax.f32 %v1017, 0.0
        %v1022 = vmax.f32 %v1018, 0.0
        %v1023 = vmax.f32 %v1019, 0.0
        %v1024 = vpack.c.bf16 %v1021, %v1020
        %v1025 = vpack.c.bf16 %v1023, %v1022
        %v1026 = vld [vmem:[#allocation6] sm:$0xf]
        %v1028 = vsel %vm538, %v1024, 0
        %v1031 = vsel %vm538, %v1025, 0
        %vm1033 = vcmask 1043456
        %v1035 = vsel %vm1033, %v1026, 0
        %1037 = vmatprep.subr.bf16.mxu0 0
        %1038 = vmatpush1.bf16.msra.mxu0 %v1035
        %1039 = vmatprep.subr.bf16.mxu0 0
        %1040 = vmatpush1.bf16.msra.mxu0 0
        %1041 = vmatprep.subr.bf16.mxu0 0
        %1042 = vmatpush1.bf16.msra.mxu0 0
        %1043 = vmatprep.subr.bf16.mxu0 0
        %1044 = vmatpush1.bf16.msra.mxu0 0
        %1045 = vmatprep.subr.bf16.mxu0 0
        %1046 = vmatpush1.bf16.msra.mxu0 0
        %1047 = vmatprep.subr.bf16.mxu0 0
        %1048 = vmatpush1.bf16.msra.mxu0 0
        %1049 = vmatprep.subr.bf16.mxu0 0
        %1050 = vmatpush1.bf16.msra.mxu0 0
        %1051 = vmatprep.subr.bf16.mxu0 0
        %1052 = vmatpush1.bf16.msra.mxu0 0
        %1053 = vmatprep.subr.bf16.mxu0 0
        %1054 = vmatpush1.bf16.msra.mxu0 0
        %1055 = vmatprep.subr.bf16.mxu0 0
        %1056 = vmatpush1.bf16.msra.mxu0 0
        %1057 = vmatprep.subr.bf16.mxu0 0
        %1058 = vmatpush1.bf16.msra.mxu0 0
        %1059 = vmatprep.subr.bf16.mxu0 0
        %1060 = vmatpush1.bf16.msra.mxu0 0
        %1061 = vmatprep.subr.bf16.mxu0 0
        %1062 = vmatpush1.bf16.msra.mxu0 0
        %1063 = vmatprep.subr.bf16.mxu0 0
        %1064 = vmatpush1.bf16.msra.mxu0 0
        %1065 = vmatprep.subr.bf16.mxu0 0
        %1066 = vmatpush1.bf16.msra.mxu0 0
        %1067 = vmatprep.subr.bf16.mxu0 0
        %1068 = vmatpush1.bf16.msra.mxu0 0
        %1069 = vmatprep.mubr.bf16.mxu0 0
        %1070 = vmatmul.mubr.bf16.gmra.mrb[0].mxu0 %v1028
        %v1071 = vpop.f32.mrb[0].mxu0
        %v1072 = vadd.f32 0.0, %v1071
        %v1073 = vpop.f32.mrb[0].mxu0
        %v1074 = vpop.f32.mrb[0].mxu0
        %v1075 = vadd.f32 0.0, %v1074
        %v1076 = vpop.f32.mrb[0].mxu0
        %1077 = vmatprep.mubr.bf16.mxu0 0
        %1078 = vmatmul.mubr.bf16.gmra.mrb[0].mxu0 %v1031
        %v1079 = vpop.f32.mrb[0].mxu0
        %v1080 = vadd.f32 0.0, %v1079
        %v1081 = vpop.f32.mrb[0].mxu0
        %v1082 = vpop.f32.mrb[0].mxu0
        %v1083 = vadd.f32 0.0, %v1082
        %v1084 = vpop.f32.mrb[0].mxu0
        %1085 = vdwg.mxu0
        %v1086 = vpack.c.bf16 %v1075, %v1072
        %v1087 = vpack.c.bf16 %v1083, %v1080
        %v1088 = vld [vmem:[%s4] sm:$0xf]
        %v1089 = vld [vmem:[%s4 + $0x4] sm:$0xf]
        %v1090 = vld [vmem:[%s4 + $0x8] sm:$0xf]
        %v1091 = vld [vmem:[%s4 + $0xc] sm:$0xf]
        %v1092 = vld [vmem:[%s4 + $0x10] sm:$0xf]
        %v1093 = vld [vmem:[%s4 + $0x14] sm:$0xf]
        %v1094 = vld [vmem:[%s4 + $0x18] sm:$0xf]
        %v1095 = vld [vmem:[%s4 + $0x1c] sm:$0xf]
        %v1096 = vld [vmem:[%s4 + $0x20] sm:$0xf]
        %v1097 = vld [vmem:[%s4 + $0x24] sm:$0xf]
        %v1098 = vld [vmem:[%s4 + $0x28] sm:$0xf]
        %v1099 = vld [vmem:[%s4 + $0x2c] sm:$0xf]
        %v1100 = vld [vmem:[%s4 + $0x30] sm:$0xf]
        %v1101 = vld [vmem:[%s4 + $0x34] sm:$0xf]
        %v1102 = vld [vmem:[%s4 + $0x38] sm:$0xf]
        %v1103 = vld [vmem:[%s4 + $0x3c] sm:$0xf]
        %v1104 = vld [vmem:[#allocation7] sm:$0xf]
        %v1105 = vld [vmem:[#allocation7 + $0x4] sm:$0xf]
        %v1106 = vld [vmem:[#allocation7 + $0x8] sm:$0xf]
        %v1107 = vld [vmem:[#allocation7 + $0xc] sm:$0xf]
        %v1108 = vld [vmem:[#allocation7 + $0x10] sm:$0xf]
        %v1109 = vld [vmem:[#allocation7 + $0x14] sm:$0xf]
        %v1110 = vld [vmem:[#allocation7 + $0x18] sm:$0xf]
        %v1111 = vld [vmem:[#allocation7 + $0x1c] sm:$0xf]
        %v1112 = vld [vmem:[#allocation7 + $0x20] sm:$0xf]
        %v1113 = vld [vmem:[#allocation7 + $0x24] sm:$0xf]
        %v1114 = vld [vmem:[#allocation7 + $0x28] sm:$0xf]
        %v1115 = vld [vmem:[#allocation7 + $0x2c] sm:$0xf]
        %v1116 = vld [vmem:[#allocation7 + $0x30] sm:$0xf]
        %v1117 = vld [vmem:[#allocation7 + $0x34] sm:$0xf]
        %v1118 = vld [vmem:[#allocation7 + $0x38] sm:$0xf]
        %v1119 = vld [vmem:[#allocation7 + $0x3c] sm:$0xf]
        %v1136 = vunpack.c.l.b16 %v1088
        %v1137 = vunpack.c.l.b16 %v1089
        %v1138 = vunpack.c.l.b16 %v1090
        %v1139 = vunpack.c.l.b16 %v1091
        %v1140 = vunpack.c.l.b16 %v1092
        %v1141 = vunpack.c.l.b16 %v1093
        %v1142 = vunpack.c.l.b16 %v1094
        %v1143 = vunpack.c.l.b16 %v1095
        %v1144 = vunpack.c.l.b16 %v1096
        %v1145 = vunpack.c.l.b16 %v1097
        %v1146 = vunpack.c.l.b16 %v1098
        %v1147 = vunpack.c.l.b16 %v1099
        %v1148 = vunpack.c.l.b16 %v1100
        %v1149 = vunpack.c.l.b16 %v1101
        %v1150 = vunpack.c.l.b16 %v1102
        %v1151 = vunpack.c.l.b16 %v1103
        %v1152 = vpack.c.b16 %v1137, %v1136
        %v1153 = vpack.c.b16 %v1139, %v1138
        %v1154 = vpack.c.b16 %v1141, %v1140
        %v1155 = vpack.c.b16 %v1143, %v1142
        %v1156 = vpack.c.b16 %v1145, %v1144
        %v1157 = vpack.c.b16 %v1147, %v1146
        %v1158 = vpack.c.b16 %v1149, %v1148
        %v1159 = vpack.c.b16 %v1151, %v1150
        %1168 = vmatprep.subr.bf16.mxu0 0
        %1169 = vmatpush1.bf16.msra.mxu0 %v1152
        %1170 = vmatprep.subr.bf16.mxu0 0
        %1171 = vmatpush1.bf16.msra.mxu0 %v1153
        %1172 = vmatprep.subr.bf16.mxu0 0
        %1173 = vmatpush1.bf16.msra.mxu0 %v1154
        %1174 = vmatprep.subr.bf16.mxu0 0
        %1175 = vmatpush1.bf16.msra.mxu0 %v1155
        %1176 = vmatprep.subr.bf16.mxu0 0
        %1177 = vmatpush1.bf16.msra.mxu0 %v1156
        %1178 = vmatprep.subr.bf16.mxu0 0
        %1179 = vmatpush1.bf16.msra.mxu0 %v1157
        %1180 = vmatprep.subr.bf16.mxu0 0
        %1181 = vmatpush1.bf16.msra.mxu0 %v1158
        %1182 = vmatprep.subr.bf16.mxu0 0
        %1183 = vmatpush1.bf16.msra.mxu0 %v1159
        %1184 = vmatprep.subr.bf16.mxu0 0
        %1185 = vmatpush1.bf16.msra.mxu0 0
        %1186 = vmatprep.subr.bf16.mxu0 0
        %1187 = vmatpush1.bf16.msra.mxu0 0
        %1188 = vmatprep.subr.bf16.mxu0 0
        %1189 = vmatpush1.bf16.msra.mxu0 0
        %1190 = vmatprep.subr.bf16.mxu0 0
        %1191 = vmatpush1.bf16.msra.mxu0 0
        %1192 = vmatprep.subr.bf16.mxu0 0
        %1193 = vmatpush1.bf16.msra.mxu0 0
        %1194 = vmatprep.subr.bf16.mxu0 0
        %1195 = vmatpush1.bf16.msra.mxu0 0
        %1196 = vmatprep.subr.bf16.mxu0 0
        %1197 = vmatpush1.bf16.msra.mxu0 0
        %1198 = vmatprep.subr.bf16.mxu0 0
        %1199 = vmatpush1.bf16.msra.mxu0 0
        %1200 = vmatprep.mubr.bf16.mxu0 0
        %1201 = vmatmul.mubr.bf16.gmra.mrb[0].mxu0 %v1086
        %v1202 = vpop.f32.mrb[0].mxu0
        %v1203 = vadd.f32 0.0, %v1202
        %v1204 = vpop.f32.mrb[0].mxu0
        %v1205 = vpop.f32.mrb[0].mxu0
        %v1206 = vadd.f32 0.0, %v1205
        %v1207 = vpop.f32.mrb[0].mxu0
        %1208 = vmatprep.mubr.bf16.mxu0 0
        %1209 = vmatmul.mubr.bf16.gmra.mrb[0].mxu0 %v1087
        %v1210 = vpop.f32.mrb[0].mxu0
        %v1211 = vadd.f32 0.0, %v1210
        %v1212 = vpop.f32.mrb[0].mxu0
        %v1213 = vpop.f32.mrb[0].mxu0
        %v1214 = vadd.f32 0.0, %v1213
        %v1215 = vpop.f32.mrb[0].mxu0
        %1216 = vdwg.mxu0
        %v1217 = vpack.c.bf16 %v1206, %v1203
        %v1218 = vpack.c.bf16 %v1214, %v1211
        %v1235 = vunpack.c.l.b16 %v1104
        %v1236 = vunpack.c.l.b16 %v1105
        %v1237 = vunpack.c.l.b16 %v1106
        %v1238 = vunpack.c.l.b16 %v1107
        %v1239 = vunpack.c.l.b16 %v1108
        %v1240 = vunpack.c.l.b16 %v1109
        %v1241 = vunpack.c.l.b16 %v1110
        %v1242 = vunpack.c.l.b16 %v1111
        %v1243 = vunpack.c.l.b16 %v1112
        %v1244 = vunpack.c.l.b16 %v1113
        %v1245 = vunpack.c.l.b16 %v1114
        %v1246 = vunpack.c.l.b16 %v1115
        %v1247 = vunpack.c.l.b16 %v1116
        %v1248 = vunpack.c.l.b16 %v1117
        %v1249 = vunpack.c.l.b16 %v1118
        %v1250 = vunpack.c.l.b16 %v1119
        %v1251 = vpack.c.b16 %v1236, %v1235
        %v1252 = vpack.c.b16 %v1238, %v1237
        %v1253 = vpack.c.b16 %v1240, %v1239
        %v1254 = vpack.c.b16 %v1242, %v1241
        %v1255 = vpack.c.b16 %v1244, %v1243
        %v1256 = vpack.c.b16 %v1246, %v1245
        %v1257 = vpack.c.b16 %v1248, %v1247
        %v1258 = vpack.c.b16 %v1250, %v1249
        %1267 = vmatprep.subr.bf16.mxu0 0
        %1268 = vmatpush1.bf16.msra.mxu0 %v1251
        %1269 = vmatprep.subr.bf16.mxu0 0
        %1270 = vmatpush1.bf16.msra.mxu0 %v1252
        %1271 = vmatprep.subr.bf16.mxu0 0
        %1272 = vmatpush1.bf16.msra.mxu0 %v1253
        %1273 = vmatprep.subr.bf16.mxu0 0
        %1274 = vmatpush1.bf16.msra.mxu0 %v1254
        %1275 = vmatprep.subr.bf16.mxu0 0
        %1276 = vmatpush1.bf16.msra.mxu0 %v1255
        %1277 = vmatprep.subr.bf16.mxu0 0
        %1278 = vmatpush1.bf16.msra.mxu0 %v1256
        %1279 = vmatprep.subr.bf16.mxu0 0
        %1280 = vmatpush1.bf16.msra.mxu0 %v1257
        %1281 = vmatprep.subr.bf16.mxu0 0
        %1282 = vmatpush1.bf16.msra.mxu0 %v1258
        %1283 = vmatprep.subr.bf16.mxu0 0
        %1284 = vmatpush1.bf16.msra.mxu0 0
        %1285 = vmatprep.subr.bf16.mxu0 0
        %1286 = vmatpush1.bf16.msra.mxu0 0
        %1287 = vmatprep.subr.bf16.mxu0 0
        %1288 = vmatpush1.bf16.msra.mxu0 0
        %1289 = vmatprep.subr.bf16.mxu0 0
        %1290 = vmatpush1.bf16.msra.mxu0 0
        %1291 = vmatprep.subr.bf16.mxu0 0
        %1292 = vmatpush1.bf16.msra.mxu0 0
        %1293 = vmatprep.subr.bf16.mxu0 0
        %1294 = vmatpush1.bf16.msra.mxu0 0
        %1295 = vmatprep.subr.bf16.mxu0 0
        %1296 = vmatpush1.bf16.msra.mxu0 0
        %1297 = vmatprep.subr.bf16.mxu0 0
        %1298 = vmatpush1.bf16.msra.mxu0 0
        %1299 = vmatprep.mubr.bf16.mxu0 0
        %1300 = vmatmul.mubr.bf16.gmra.mrb[0].mxu0 %v1086
        %v1301 = vpop.f32.mrb[0].mxu0
        %v1302 = vadd.f32 0.0, %v1301
        %v1303 = vpop.f32.mrb[0].mxu0
        %v1304 = vpop.f32.mrb[0].mxu0
        %v1305 = vadd.f32 0.0, %v1304
        %v1306 = vpop.f32.mrb[0].mxu0
        %1307 = vmatprep.mubr.bf16.mxu0 0
        %1308 = vmatmul.mubr.bf16.gmra.mrb[0].mxu0 %v1087
        %v1309 = vpop.f32.mrb[0].mxu0
        %v1310 = vadd.f32 0.0, %v1309
        %v1311 = vpop.f32.mrb[0].mxu0
        %v1312 = vpop.f32.mrb[0].mxu0
        %v1313 = vadd.f32 0.0, %v1312
        %v1314 = vpop.f32.mrb[0].mxu0
        %1315 = vdwg.mxu0
        %v1316 = vpack.c.bf16 %v1305, %v1302
        %v1317 = vpack.c.bf16 %v1313, %v1310
        %v1318 = vld [vmem:[#allocation10] sm:$0xf]
        %v1319 = vld [vmem:[#allocation10 + $0x4] sm:$0xf]
        %v1320 = vld [vmem:[#allocation10 + $0x8] sm:$0xf]
        %v1321 = vld [vmem:[#allocation10 + $0xc] sm:$0xf]
        %s1322 = scalar_lea.vmem [#allocation10], 16
        %v1323 = vld [vmem:[%s1322] sm:$0xf]
        %v1324 = vld [vmem:[%s1322 + $0x4] sm:$0xf]
        %v1325 = vld [vmem:[%s1322 + $0x8] sm:$0xf]
        %v1326 = vld [vmem:[%s1322 + $0xc] sm:$0xf]
        %v1331 = vunpack.c.l.b16 %v1323
        %v1332 = vunpack.c.l.b16 %v1324
        %v1333 = vunpack.c.l.b16 %v1325
        %v1334 = vunpack.c.l.b16 %v1326
        %v1335 = vpack.c.b16 %v1332, %v1331
        %v1336 = vpack.c.b16 %v1334, %v1333
        %vm1337 = vcmask 261120
        %v1339 = vsel %vm1337, %v1335, 0
        %v1342 = vsel %vm1337, %v1336, 0
        %1344 = vmatprep.subr.bf16.mxu0 0
        %1345 = vmatpush1.bf16.msra.mxu0 %v1217
        %1346 = vmatprep.subr.bf16.mxu0 0
        %1347 = vmatpush1.bf16.msra.mxu0 %v1218
        %1348 = vmatprep.subr.bf16.mxu0 0
        %1349 = vmatpush1.bf16.msra.mxu0 0
        %1350 = vmatprep.subr.bf16.mxu0 0
        %1351 = vmatpush1.bf16.msra.mxu0 0
        %1352 = vmatprep.subr.bf16.mxu0 0
        %1353 = vmatpush1.bf16.msra.mxu0 0
        %1354 = vmatprep.subr.bf16.mxu0 0
        %1355 = vmatpush1.bf16.msra.mxu0 0
        %1356 = vmatprep.subr.bf16.mxu0 0
        %1357 = vmatpush1.bf16.msra.mxu0 0
        %1358 = vmatprep.subr.bf16.mxu0 0
        %1359 = vmatpush1.bf16.msra.mxu0 0
        %1360 = vmatprep.subr.bf16.mxu0 0
        %1361 = vmatpush1.bf16.msra.mxu0 0
        %1362 = vmatprep.subr.bf16.mxu0 0
        %1363 = vmatpush1.bf16.msra.mxu0 0
        %1364 = vmatprep.subr.bf16.mxu0 0
        %1365 = vmatpush1.bf16.msra.mxu0 0
        %1366 = vmatprep.subr.bf16.mxu0 0
        %1367 = vmatpush1.bf16.msra.mxu0 0
        %1368 = vmatprep.subr.bf16.mxu0 0
        %1369 = vmatpush1.bf16.msra.mxu0 0
        %1370 = vmatprep.subr.bf16.mxu0 0
        %1371 = vmatpush1.bf16.msra.mxu0 0
        %1372 = vmatprep.subr.bf16.mxu0 0
        %1373 = vmatpush1.bf16.msra.mxu0 0
        %1374 = vmatprep.subr.bf16.mxu0 0
        %1375 = vmatpush1.bf16.msra.mxu0 0
        %1376 = vmatprep.mubr.bf16.mxu0 0
        %1377 = vmatmul.mubr.bf16.gmra.mrb[0].mxu0 %v1339
        %v1378 = vpop.f32.mrb[0].mxu0
        %v1379 = vadd.f32 0.0, %v1378
        %v1380 = vpop.f32.mrb[0].mxu0
        %v1381 = vpop.f32.mrb[0].mxu0
        %v1382 = vadd.f32 0.0, %v1381
        %v1383 = vpop.f32.mrb[0].mxu0
        %1384 = vmatprep.mubr.bf16.mxu0 0
        %1385 = vmatmul.mubr.bf16.gmra.mrb[0].mxu0 %v1342
        %v1386 = vpop.f32.mrb[0].mxu0
        %v1387 = vadd.f32 0.0, %v1386
        %v1388 = vpop.f32.mrb[0].mxu0
        %v1389 = vpop.f32.mrb[0].mxu0
        %v1390 = vadd.f32 0.0, %v1389
        %v1391 = vpop.f32.mrb[0].mxu0
        %1392 = vdwg.mxu0
        %v1397 = vunpack.c.l.b16 %v1318
        %v1398 = vunpack.c.l.b16 %v1319
        %v1399 = vunpack.c.l.b16 %v1320
        %v1400 = vunpack.c.l.b16 %v1321
        %v1401 = vpack.c.b16 %v1398, %v1397
        %v1402 = vpack.c.b16 %v1400, %v1399
        %v1404 = vsel %vm1337, %v1401, 0
        %v1407 = vsel %vm1337, %v1402, 0
        %1409 = vmatprep.subr.bf16.mxu0 0
        %1410 = vmatpush1.bf16.msra.mxu0 %v1086
        %1411 = vmatprep.subr.bf16.mxu0 0
        %1412 = vmatpush1.bf16.msra.mxu0 %v1087
        %1413 = vmatprep.subr.bf16.mxu0 0
        %1414 = vmatpush1.bf16.msra.mxu0 0
        %1415 = vmatprep.subr.bf16.mxu0 0
        %1416 = vmatpush1.bf16.msra.mxu0 0
        %1417 = vmatprep.subr.bf16.mxu0 0
        %1418 = vmatpush1.bf16.msra.mxu0 0
        %1419 = vmatprep.subr.bf16.mxu0 0
        %1420 = vmatpush1.bf16.msra.mxu0 0
        %1421 = vmatprep.subr.bf16.mxu0 0
        %1422 = vmatpush1.bf16.msra.mxu0 0
        %1423 = vmatprep.subr.bf16.mxu0 0
        %1424 = vmatpush1.bf16.msra.mxu0 0
        %1425 = vmatprep.subr.bf16.mxu0 0
        %1426 = vmatpush1.bf16.msra.mxu0 0
        %1427 = vmatprep.subr.bf16.mxu0 0
        %1428 = vmatpush1.bf16.msra.mxu0 0
        %1429 = vmatprep.subr.bf16.mxu0 0
        %1430 = vmatpush1.bf16.msra.mxu0 0
        %1431 = vmatprep.subr.bf16.mxu0 0
        %1432 = vmatpush1.bf16.msra.mxu0 0
        %1433 = vmatprep.subr.bf16.mxu0 0
        %1434 = vmatpush1.bf16.msra.mxu0 0
        %1435 = vmatprep.subr.bf16.mxu0 0
        %1436 = vmatpush1.bf16.msra.mxu0 0
        %1437 = vmatprep.subr.bf16.mxu0 0
        %1438 = vmatpush1.bf16.msra.mxu0 0
        %1439 = vmatprep.subr.bf16.mxu0 0
        %1440 = vmatpush1.bf16.msra.mxu0 0
        %1441 = vmatprep.mubr.bf16.mxu0 0
        %1442 = vmatmul.mubr.bf16.gmra.mrb[0].mxu0 %v1404
        %v1443 = vpop.f32.mrb[0].mxu0
        %v1444 = vadd.f32 %v1379, %v1443
        %v1445 = vpop.f32.mrb[0].mxu0
        %v1446 = vpop.f32.mrb[0].mxu0
        %v1447 = vadd.f32 %v1382, %v1446
        %v1448 = vpop.f32.mrb[0].mxu0
        %1449 = vmatprep.mubr.bf16.mxu0 0
        %1450 = vmatmul.mubr.bf16.gmra.mrb[0].mxu0 %v1407
        %v1451 = vpop.f32.mrb[0].mxu0
        %v1452 = vadd.f32 %v1387, %v1451
        %v1453 = vpop.f32.mrb[0].mxu0
        %v1454 = vpop.f32.mrb[0].mxu0
        %v1455 = vadd.f32 %v1390, %v1454
        %v1456 = vpop.f32.mrb[0].mxu0
        %1457 = vdwg.mxu0
        %s1458 = scalar_lea.vmem [#allocation10], 32
        %v1459 = vld [vmem:[%s1458] sm:$0xf]
        %v1460 = vld [vmem:[%s1458 + $0x4] sm:$0xf]
        %v1461 = vld [vmem:[%s1458 + $0x8] sm:$0xf]
        %v1462 = vld [vmem:[%s1458 + $0xc] sm:$0xf]
        %v1467 = vunpack.c.l.b16 %v1459
        %v1468 = vunpack.c.l.b16 %v1460
        %v1469 = vunpack.c.l.b16 %v1461
        %v1470 = vunpack.c.l.b16 %v1462
        %v1471 = vpack.c.b16 %v1468, %v1467
        %v1472 = vpack.c.b16 %v1470, %v1469
        %v1474 = vsel %vm1337, %v1471, 0
        %v1477 = vsel %vm1337, %v1472, 0
        %1479 = vmatprep.subr.bf16.mxu0 0
        %1480 = vmatpush1.bf16.msra.mxu0 %v1316
        %1481 = vmatprep.subr.bf16.mxu0 0
        %1482 = vmatpush1.bf16.msra.mxu0 %v1317
        %1483 = vmatprep.subr.bf16.mxu0 0
        %1484 = vmatpush1.bf16.msra.mxu0 0
        %1485 = vmatprep.subr.bf16.mxu0 0
        %1486 = vmatpush1.bf16.msra.mxu0 0
        %1487 = vmatprep.subr.bf16.mxu0 0
        %1488 = vmatpush1.bf16.msra.mxu0 0
        %1489 = vmatprep.subr.bf16.mxu0 0
        %1490 = vmatpush1.bf16.msra.mxu0 0
        %1491 = vmatprep.subr.bf16.mxu0 0
        %1492 = vmatpush1.bf16.msra.mxu0 0
        %1493 = vmatprep.subr.bf16.mxu0 0
        %1494 = vmatpush1.bf16.msra.mxu0 0
        %1495 = vmatprep.subr.bf16.mxu0 0
        %1496 = vmatpush1.bf16.msra.mxu0 0
        %1497 = vmatprep.subr.bf16.mxu0 0
        %1498 = vmatpush1.bf16.msra.mxu0 0
        %1499 = vmatprep.subr.bf16.mxu0 0
        %1500 = vmatpush1.bf16.msra.mxu0 0
        %1501 = vmatprep.subr.bf16.mxu0 0
        %1502 = vmatpush1.bf16.msra.mxu0 0
        %1503 = vmatprep.subr.bf16.mxu0 0
        %1504 = vmatpush1.bf16.msra.mxu0 0
        %1505 = vmatprep.subr.bf16.mxu0 0
        %1506 = vmatpush1.bf16.msra.mxu0 0
        %1507 = vmatprep.subr.bf16.mxu0 0
        %1508 = vmatpush1.bf16.msra.mxu0 0
        %1509 = vmatprep.subr.bf16.mxu0 0
        %1510 = vmatpush1.bf16.msra.mxu0 0
        %1511 = vmatprep.mubr.bf16.mxu0 0
        %1512 = vmatmul.mubr.bf16.gmra.mrb[0].mxu0 %v1474
        %v1513 = vpop.f32.mrb[0].mxu0
        %v1514 = vadd.f32 0.0, %v1513
        %v1515 = vpop.f32.mrb[0].mxu0
        %v1516 = vpop.f32.mrb[0].mxu0
        %v1517 = vadd.f32 0.0, %v1516
        %v1518 = vpop.f32.mrb[0].mxu0
        %1519 = vmatprep.mubr.bf16.mxu0 0
        %1520 = vmatmul.mubr.bf16.gmra.mrb[0].mxu0 %v1477
        %v1521 = vpop.f32.mrb[0].mxu0
        %v1522 = vadd.f32 0.0, %v1521
        %v1523 = vpop.f32.mrb[0].mxu0
        %v1524 = vpop.f32.mrb[0].mxu0
        %v1525 = vadd.f32 0.0, %v1524
        %v1526 = vpop.f32.mrb[0].mxu0
        %1527 = vdwg.mxu0
        %v1528 = vadd.f32 %v1444, %v1514
        %v1529 = vadd.f32 %v1447, %v1517
        %v1530 = vadd.f32 %v1452, %v1522
        %v1531 = vadd.f32 %v1455, %v1525
        %v1532 = vld [vmem:[#allocation12] sm:$0xff]
        %v1533 = vld [vmem:[#allocation12 + $0x8] sm:$0xff]
        %v1534 = vld [vmem:[#allocation12 + $0x10] sm:$0xff]
        %v1535 = vld [vmem:[#allocation12 + $0x18] sm:$0xff]
        %1537 = vset.pattern.permute.xlu0 0
        %1538 = vperm.xlu0 %1537, %v1532
        %v1539 = vpop.permute.xlu0 %1538
        %1542 = vset.pattern.permute.xlu0 0
        %1543 = vperm.xlu0 %1542, %v1533
        %v1544 = vpop.permute.xlu0 %1543
        %1547 = vset.pattern.permute.xlu0 0
        %1548 = vperm.xlu0 %1547, %v1534
        %v1549 = vpop.permute.xlu0 %1548
        %1552 = vset.pattern.permute.xlu0 0
        %1553 = vperm.xlu0 %1552, %v1535
        %v1554 = vpop.permute.xlu0 %1553
        %v1556 = vadd.f32 %v1528, %v1539
        %v1557 = vadd.f32 %v1529, %v1544
        %v1558 = vadd.f32 %v1530, %v1549
        %v1559 = vadd.f32 %v1531, %v1554
        %v1560 = vmax.f32 %v1556, 0.0
        %v1561 = vmax.f32 %v1557, 0.0
        %v1562 = vmax.f32 %v1558, 0.0
        %v1563 = vmax.f32 %v1559, 0.0
        %v1564 = vsel %vm535, 1, 0
        %vm1565 = vcmp.eq.s32.totalorder %v1564, 1
        %v1566 = vsel %vm1565, %v1560, 0.0
        %v1567 = vsel %vm1565, %v1561, 0.0
        %v1568 = vsel %vm1565, %v1562, 0.0
        %v1569 = vsel %vm1565, %v1563, 0.0
        %v1570 = vpack.c.bf16 %v1567, %v1566
        %v1571 = vpack.c.bf16 %v1569, %v1568
        %1572 = vmatprep.subr.bf16.mxu0 0
        %1573 = vmatpush1.bf16.msra.mxu0 %v1152
        %1574 = vmatprep.subr.bf16.mxu0 0
        %1575 = vmatpush1.bf16.msra.mxu0 %v1153
        %1576 = vmatprep.subr.bf16.mxu0 0
        %1577 = vmatpush1.bf16.msra.mxu0 %v1154
        %1578 = vmatprep.subr.bf16.mxu0 0
        %1579 = vmatpush1.bf16.msra.mxu0 %v1155
        %1580 = vmatprep.subr.bf16.mxu0 0
        %1581 = vmatpush1.bf16.msra.mxu0 %v1156
        %1582 = vmatprep.subr.bf16.mxu0 0
        %1583 = vmatpush1.bf16.msra.mxu0 %v1157
        %1584 = vmatprep.subr.bf16.mxu0 0
        %1585 = vmatpush1.bf16.msra.mxu0 %v1158
        %1586 = vmatprep.subr.bf16.mxu0 0
        %1587 = vmatpush1.bf16.msra.mxu0 %v1159
        %1588 = vmatprep.subr.bf16.mxu0 0
        %1589 = vmatpush1.bf16.msra.mxu0 0
        %1590 = vmatprep.subr.bf16.mxu0 0
        %1591 = vmatpush1.bf16.msra.mxu0 0
        %1592 = vmatprep.subr.bf16.mxu0 0
        %1593 = vmatpush1.bf16.msra.mxu0 0
        %1594 = vmatprep.subr.bf16.mxu0 0
        %1595 = vmatpush1.bf16.msra.mxu0 0
        %1596 = vmatprep.subr.bf16.mxu0 0
        %1597 = vmatpush1.bf16.msra.mxu0 0
        %1598 = vmatprep.subr.bf16.mxu0 0
        %1599 = vmatpush1.bf16.msra.mxu0 0
        %1600 = vmatprep.subr.bf16.mxu0 0
        %1601 = vmatpush1.bf16.msra.mxu0 0
        %1602 = vmatprep.subr.bf16.mxu0 0
        %1603 = vmatpush1.bf16.msra.mxu0 0
        %1604 = vmatprep.mubr.bf16.mxu0 0
        %1605 = vmatmul.mubr.bf16.gmra.mrb[0].mxu0 %v1570
        %v1606 = vpop.f32.mrb[0].mxu0
        %v1607 = vadd.f32 0.0, %v1606
        %v1608 = vpop.f32.mrb[0].mxu0
        %v1609 = vpop.f32.mrb[0].mxu0
        %v1610 = vadd.f32 0.0, %v1609
        %v1611 = vpop.f32.mrb[0].mxu0
        %1612 = vmatprep.mubr.bf16.mxu0 0
        %1613 = vmatmul.mubr.bf16.gmra.mrb[0].mxu0 %v1571
        %v1614 = vpop.f32.mrb[0].mxu0
        %v1615 = vadd.f32 0.0, %v1614
        %v1616 = vpop.f32.mrb[0].mxu0
        %v1617 = vpop.f32.mrb[0].mxu0
        %v1618 = vadd.f32 0.0, %v1617
        %v1619 = vpop.f32.mrb[0].mxu0
        %1620 = vdwg.mxu0
        %v1621 = vpack.c.bf16 %v1610, %v1607
        %v1622 = vpack.c.bf16 %v1618, %v1615
        %1623 = vmatprep.subr.bf16.mxu0 0
        %1624 = vmatpush1.bf16.msra.mxu0 %v1251
        %1625 = vmatprep.subr.bf16.mxu0 0
        %1626 = vmatpush1.bf16.msra.mxu0 %v1252
        %1627 = vmatprep.subr.bf16.mxu0 0
        %1628 = vmatpush1.bf16.msra.mxu0 %v1253
        %1629 = vmatprep.subr.bf16.mxu0 0
        %1630 = vmatpush1.bf16.msra.mxu0 %v1254
        %1631 = vmatprep.subr.bf16.mxu0 0
        %1632 = vmatpush1.bf16.msra.mxu0 %v1255
        %1633 = vmatprep.subr.bf16.mxu0 0
        %1634 = vmatpush1.bf16.msra.mxu0 %v1256
        %1635 = vmatprep.subr.bf16.mxu0 0
        %1636 = vmatpush1.bf16.msra.mxu0 %v1257
        %1637 = vmatprep.subr.bf16.mxu0 0
        %1638 = vmatpush1.bf16.msra.mxu0 %v1258
        %1639 = vmatprep.subr.bf16.mxu0 0
        %1640 = vmatpush1.bf16.msra.mxu0 0
        %1641 = vmatprep.subr.bf16.mxu0 0
        %1642 = vmatpush1.bf16.msra.mxu0 0
        %1643 = vmatprep.subr.bf16.mxu0 0
        %1644 = vmatpush1.bf16.msra.mxu0 0
        %1645 = vmatprep.subr.bf16.mxu0 0
        %1646 = vmatpush1.bf16.msra.mxu0 0
        %1647 = vmatprep.subr.bf16.mxu0 0
        %1648 = vmatpush1.bf16.msra.mxu0 0
        %1649 = vmatprep.subr.bf16.mxu0 0
        %1650 = vmatpush1.bf16.msra.mxu0 0
        %1651 = vmatprep.subr.bf16.mxu0 0
        %1652 = vmatpush1.bf16.msra.mxu0 0
        %1653 = vmatprep.subr.bf16.mxu0 0
        %1654 = vmatpush1.bf16.msra.mxu0 0
        %1655 = vmatprep.mubr.bf16.mxu0 0
        %1656 = vmatmul.mubr.bf16.gmra.mrb[0].mxu0 %v1570
        %v1657 = vpop.f32.mrb[0].mxu0
        %v1658 = vadd.f32 0.0, %v1657
        %v1659 = vpop.f32.mrb[0].mxu0
        %v1660 = vpop.f32.mrb[0].mxu0
        %v1661 = vadd.f32 0.0, %v1660
        %v1662 = vpop.f32.mrb[0].mxu0
        %1663 = vmatprep.mubr.bf16.mxu0 0
        %1664 = vmatmul.mubr.bf16.gmra.mrb[0].mxu0 %v1571
        %v1665 = vpop.f32.mrb[0].mxu0
        %v1666 = vadd.f32 0.0, %v1665
        %v1667 = vpop.f32.mrb[0].mxu0
        %v1668 = vpop.f32.mrb[0].mxu0
        %v1669 = vadd.f32 0.0, %v1668
        %v1670 = vpop.f32.mrb[0].mxu0
        %1671 = vdwg.mxu0
        %v1672 = vpack.c.bf16 %v1661, %v1658
        %v1673 = vpack.c.bf16 %v1669, %v1666
        %v1674 = vld [vmem:[#allocation13] sm:$0xf]
        %s1675 = scalar_lea.vmem [#allocation13], 4
        %v1676 = vld [vmem:[%s1675] sm:$0xf]
        %v1678 = vsel %vm1337, %v1676, 0
        %1680 = vmatprep.subr.bf16.mxu0 0
        %1681 = vmatpush1.bf16.msra.mxu0 %v1621
        %1682 = vmatprep.subr.bf16.mxu0 0
        %1683 = vmatpush1.bf16.msra.mxu0 %v1622
        %1684 = vmatprep.subr.bf16.mxu0 0
        %1685 = vmatpush1.bf16.msra.mxu0 0
        %1686 = vmatprep.subr.bf16.mxu0 0
        %1687 = vmatpush1.bf16.msra.mxu0 0
        %1688 = vmatprep.subr.bf16.mxu0 0
        %1689 = vmatpush1.bf16.msra.mxu0 0
        %1690 = vmatprep.subr.bf16.mxu0 0
        %1691 = vmatpush1.bf16.msra.mxu0 0
        %1692 = vmatprep.subr.bf16.mxu0 0
        %1693 = vmatpush1.bf16.msra.mxu0 0
        %1694 = vmatprep.subr.bf16.mxu0 0
        %1695 = vmatpush1.bf16.msra.mxu0 0
        %1696 = vmatprep.subr.bf16.mxu0 0
        %1697 = vmatpush1.bf16.msra.mxu0 0
        %1698 = vmatprep.subr.bf16.mxu0 0
        %1699 = vmatpush1.bf16.msra.mxu0 0
        %1700 = vmatprep.subr.bf16.mxu0 0
        %1701 = vmatpush1.bf16.msra.mxu0 0
        %1702 = vmatprep.subr.bf16.mxu0 0
        %1703 = vmatpush1.bf16.msra.mxu0 0
        %1704 = vmatprep.subr.bf16.mxu0 0
        %1705 = vmatpush1.bf16.msra.mxu0 0
        %1706 = vmatprep.subr.bf16.mxu0 0
        %1707 = vmatpush1.bf16.msra.mxu0 0
        %1708 = vmatprep.subr.bf16.mxu0 0
        %1709 = vmatpush1.bf16.msra.mxu0 0
        %1710 = vmatprep.subr.bf16.mxu0 0
        %1711 = vmatpush1.bf16.msra.mxu0 0
        %1712 = vmatprep.mubr.bf16.mxu0 0
        %1713 = vmatmul.mubr.bf16.gmra.mrb[0].mxu0 %v1678
        %v1714 = vpop.f32.mrb[0].mxu0
        %v1715 = vadd.f32 0.0, %v1714
        %v1716 = vpop.f32.mrb[0].mxu0
        %v1717 = vpop.f32.mrb[0].mxu0
        %v1718 = vpop.f32.mrb[0].mxu0
        %1719 = vdwg.mxu0
        %v1721 = vsel %vm1337, %v1674, 0
        %1723 = vmatprep.subr.bf16.mxu0 0
        %1724 = vmatpush1.bf16.msra.mxu0 %v1570
        %1725 = vmatprep.subr.bf16.mxu0 0
        %1726 = vmatpush1.bf16.msra.mxu0 %v1571
        %1727 = vmatprep.subr.bf16.mxu0 0
        %1728 = vmatpush1.bf16.msra.mxu0 0
        %1729 = vmatprep.subr.bf16.mxu0 0
        %1730 = vmatpush1.bf16.msra.mxu0 0
        %1731 = vmatprep.subr.bf16.mxu0 0
        %1732 = vmatpush1.bf16.msra.mxu0 0
        %1733 = vmatprep.subr.bf16.mxu0 0
        %1734 = vmatpush1.bf16.msra.mxu0 0
        %1735 = vmatprep.subr.bf16.mxu0 0
        %1736 = vmatpush1.bf16.msra.mxu0 0
        %1737 = vmatprep.subr.bf16.mxu0 0
        %1738 = vmatpush1.bf16.msra.mxu0 0
        %1739 = vmatprep.subr.bf16.mxu0 0
        %1740 = vmatpush1.bf16.msra.mxu0 0
        %1741 = vmatprep.subr.bf16.mxu0 0
        %1742 = vmatpush1.bf16.msra.mxu0 0
        %1743 = vmatprep.subr.bf16.mxu0 0
        %1744 = vmatpush1.bf16.msra.mxu0 0
        %1745 = vmatprep.subr.bf16.mxu0 0
        %1746 = vmatpush1.bf16.msra.mxu0 0
        %1747 = vmatprep.subr.bf16.mxu0 0
        %1748 = vmatpush1.bf16.msra.mxu0 0
        %1749 = vmatprep.subr.bf16.mxu0 0
        %1750 = vmatpush1.bf16.msra.mxu0 0
        %1751 = vmatprep.subr.bf16.mxu0 0
        %1752 = vmatpush1.bf16.msra.mxu0 0
        %1753 = vmatprep.subr.bf16.mxu0 0
        %1754 = vmatpush1.bf16.msra.mxu0 0
        %1755 = vmatprep.mubr.bf16.mxu0 0
        %1756 = vmatmul.mubr.bf16.gmra.mrb[0].mxu0 %v1721
        %v1757 = vpop.f32.mrb[0].mxu0
        %v1758 = vadd.f32 %v1715, %v1757
        %v1759 = vpop.f32.mrb[0].mxu0
        %v1760 = vpop.f32.mrb[0].mxu0
        %v1761 = vpop.f32.mrb[0].mxu0
        %1762 = vdwg.mxu0
        %s1763 = scalar_lea.vmem [#allocation13], 8
        %v1764 = vld [vmem:[%s1763] sm:$0xf]
        %v1766 = vsel %vm1337, %v1764, 0
        %1768 = vmatprep.subr.bf16.mxu0 0
        %1769 = vmatpush1.bf16.msra.mxu0 %v1672
        %1770 = vmatprep.subr.bf16.mxu0 0
        %1771 = vmatpush1.bf16.msra.mxu0 %v1673
        %1772 = vmatprep.subr.bf16.mxu0 0
        %1773 = vmatpush1.bf16.msra.mxu0 0
        %1774 = vmatprep.subr.bf16.mxu0 0
        %1775 = vmatpush1.bf16.msra.mxu0 0
        %1776 = vmatprep.subr.bf16.mxu0 0
        %1777 = vmatpush1.bf16.msra.mxu0 0
        %1778 = vmatprep.subr.bf16.mxu0 0
        %1779 = vmatpush1.bf16.msra.mxu0 0
        %1780 = vmatprep.subr.bf16.mxu0 0
        %1781 = vmatpush1.bf16.msra.mxu0 0
        %1782 = vmatprep.subr.bf16.mxu0 0
        %1783 = vmatpush1.bf16.msra.mxu0 0
        %1784 = vmatprep.subr.bf16.mxu0 0
        %1785 = vmatpush1.bf16.msra.mxu0 0
        %1786 = vmatprep.subr.bf16.mxu0 0
        %1787 = vmatpush1.bf16.msra.mxu0 0
        %1788 = vmatprep.subr.bf16.mxu0 0
        %1789 = vmatpush1.bf16.msra.mxu0 0
        %1790 = vmatprep.subr.bf16.mxu0 0
        %1791 = vmatpush1.bf16.msra.mxu0 0
        %1792 = vmatprep.subr.bf16.mxu0 0
        %1793 = vmatpush1.bf16.msra.mxu0 0
        %1794 = vmatprep.subr.bf16.mxu0 0
        %1795 = vmatpush1.bf16.msra.mxu0 0
        %1796 = vmatprep.subr.bf16.mxu0 0
        %1797 = vmatpush1.bf16.msra.mxu0 0
        %1798 = vmatprep.subr.bf16.mxu0 0
        %1799 = vmatpush1.bf16.msra.mxu0 0
        %1800 = vmatprep.mubr.bf16.mxu0 0
        %1801 = vmatmul.mubr.bf16.gmra.mrb[0].mxu0 %v1766
        %v1802 = vpop.f32.mrb[0].mxu0
        %v1803 = vadd.f32 0.0, %v1802
        %v1804 = vpop.f32.mrb[0].mxu0
        %v1805 = vpop.f32.mrb[0].mxu0
        %v1806 = vpop.f32.mrb[0].mxu0
        %1807 = vdwg.mxu0
        %v1808 = vadd.f32 %v1758, %v1803
        %v1809 = vld [vmem:[#allocation15] sm:$0xff]
        %1811 = vset.pattern.permute.xlu0 0
        %1812 = vperm.xlu0 %1811, %v1809
        %v1813 = vpop.permute.xlu0 %1812
        %v1815 = vadd.f32 %v1808, %v1813
        %v1816 = vsel %vm1565, %v1815, 0.0
        %1817 = vst [vmem:[%s531] sm:$0xff] %v1816
        %p1818 = scmp.lt.s32.totalorder %s28, 1
        %s1819 = scalar_select %p1818, %s28, 1
        %s1820 = smul.addr %s1819, 8
        %s1821 = scalar_lea.vmem %s12, %s1820
        // Predicated region
        $region105: #{_lambda_.1} parent=67 // pred_check
          %p1822 = pneg %p303
        $region106: #{_lambda_.1} parent=67 // pred_check_branch
          %1824 = sbr.rel (%p1822) target = $region108
        $region107: #{_lambda_.1} parent=67 // pred_region
          _
        $region108: #{_lambda_.1} parent=67 // pred_fallthru
          _
      $region68: #{_lambda_.1} parent=5 // pred_fallthru
        _
      %p1825 = scmp.le.s32.totalorder 2, %s23
      // Predicated region
      $region109: #{_lambda_.1} parent=5 // pred_check
        %p1826 = pneg %p1825
      $region110: #{_lambda_.1} parent=5 // pred_check_branch
        %1828 = sbr.rel (%p1826) target = $region112
      $region111: #{_lambda_.1} parent=5 // pred_region
        %s1829 = ssub.s32 %s23, 2
        // Predicated region
        $region113: #{_lambda_.1} parent=111 // pred_check
          %p1830 = pneg %p309
        $region114: #{_lambda_.1} parent=111 // pred_check_branch
          %1832 = sbr.rel (%p1830) target = $region116
        $region115: #{_lambda_.1} parent=111 // pred_region
          %p1833 = scmp.lt.s32.totalorder %s29, 1
          %s1834 = scalar_select %p1833, %s29, 1
          %s1835 = smul.addr %s1834, 8
          %s1836 = scalar_lea.vmem %s12, %s1835
        $region116: #{_lambda_.1} parent=111 // pred_fallthru
          _
      $region112: #{_lambda_.1} parent=5 // pred_fallthru
        _
    $region6: #{_lambda_.1} parent=1 // loop_footer
      %s27 = sadd.s32 1, %s23
    $region7: #{_lambda_.1} parent=1 // loop_footer_branch
      %22 = sbr.rel target = $region3
    $region8: #{_lambda_.1} parent=1 // loop_exit
      _
    %1837 = vsyncpa [#allocation3], 1
    %s1838 = scalar_lea.sflag [#allocation3], 1
    %1839 = vsyncpa %s1838, 1
    %1840 = vsyncpa [#allocation5], 1
    %1841 = vsyncpa [#allocation8], 1
    %1842 = vsyncpa [#allocation11], 1
    %1843 = vsyncpa [#allocation14], 1

</llo_original>
